<compile_context>
chip_gen: v7x
topology: tpu7x:2x2x1
jax: 0.10.0
libtpu: 0.0.40
codegen_flags: <defaults>
</compile_context>

<pallas_src>
import functools
import math

import jax
import jax.numpy as jnp
import numpy as np
from jax.experimental import pallas as pl
from jax.experimental.pallas import tpu as pltpu

LN_EPS = 1e-5            # config.layer_norm_eps
_SQRT1_2 = 1.0 / math.sqrt(2.0)
_NEG_BIG = -1e9          # padding value for unused logit columns


def _round_up(x, m):
    return (x + m - 1) // m * m


def scorer_kernel(h1_ref, h2_ref, labels_ref,
                  wdT_ref, bd_ref, gamma_ref, beta_ref, wdecT_ref, cbias_ref,
                  logits_ref, nll_ref,
                  acc_ref,
                  *, inv_tokens, last_local_idx):
    """Grid = (B tiles, S tiles).  acc_ref accumulates sum_t (h1 - h2) per (TB, D)."""
    s = pl.program_id(1)

    @pl.when(s == 0)
    def _init():
        acc_ref[...] = jnp.zeros_like(acc_ref)

    # Stream phase: accumulate the token-sum of (h1 - h2) in f32 (inputs may be bf16).
    diff = h1_ref[...].astype(jnp.float32) - h2_ref[...].astype(jnp.float32)  # (TB,TS,D)
    acc_ref[...] += jnp.sum(diff, axis=1)                                     # (TB,D)

    @pl.when(s == pl.num_programs(1) - 1)
    def _epilogue():
        # Exclude the final real token (torch slice [:, 0:-1, :]); it always lives
        # in the last S tile at static row `last_local_idx` (padding rows are zero).
        last_row = (h1_ref[:, last_local_idx, :].astype(jnp.float32)
                    - h2_ref[:, last_local_idx, :].astype(jnp.float32))       # (TB,D)
        distance = jnp.abs((acc_ref[...] - last_row) * inv_tokens)            # (TB,D)

        # ScoreHead.dense: x @ W^T + b  (weight passed pre-transposed: (D,D))
        x = jax.lax.dot_general(distance, wdT_ref[...], (((1,), (0,)), ((), ())),
                                preferred_element_type=jnp.float32)
        x = x + bd_ref[...]

        # exact ESM gelu: x * 0.5 * (1 + erf(x / sqrt(2)))
        x = x * 0.5 * (1.0 + jax.lax.erf(x * _SQRT1_2))

        # LayerNorm over last dim (biased variance, like torch.nn.LayerNorm)
        mu = jnp.mean(x, axis=-1, keepdims=True)
        var = jnp.mean((x - mu) * (x - mu), axis=-1, keepdims=True)
        xn = (x - mu) * jax.lax.rsqrt(var + LN_EPS)
        x = xn * gamma_ref[...] + beta_ref[...]                               # (TB,D)

        # decoder (no bias) + separate bias parameter; weight pre-transposed (D,Cpad)
        logits = jax.lax.dot_general(x, wdecT_ref[...], (((1,), (0,)), ((), ())),
                                     preferred_element_type=jnp.float32)
        logits = logits + cbias_ref[...]                                      # (TB,Cpad)
        logits_ref[...] = logits

        # Per-example cross entropy (padded columns carry -1e9 bias -> no effect).
        m = jnp.max(logits, axis=-1, keepdims=True)
        lse = m + jnp.log(jnp.sum(jnp.exp(logits - m), axis=-1, keepdims=True))
        cls_ids = jax.lax.broadcasted_iota(jnp.int32, logits.shape, 1)
        onehot = (cls_ids == labels_ref[...]).astype(jnp.float32)
        picked = jnp.sum(logits * onehot, axis=-1, keepdims=True)
        nll_ref[...] = lse - picked                                           # (TB,1)


def scorer_forward(h1, h2, labels, params, *, tb=8, ts=None):
    """h1, h2: (B, S, D) encoder outputs (f32 or bf16); labels: (B,) int32.

    Returns (logits (B, C) f32, loss scalar f32)."""
    B, S, D = h1.shape
    assert h2.shape == (B, S, D)
    if S <= 1:
        raise ValueError("Scorer needs S > 1 (mean over tokens [0, S-1)).")
    C = params["cbias"].shape[0]
    C_pad = _round_up(max(C, 128), 128)

    itemsize = jnp.dtype(h1.dtype).itemsize
    tb = max(8, (tb // 8) * 8)
    if ts is None:
        # ~8 MiB per input per pipeline buffer (fits v7x's 64 MiB VMEM with
        # 2 inputs x 2 buffers + resident weights; v5e/v6e have more headroom).
        per_row = tb * D * itemsize
        ts = max(16, min(((8 << 20) // max(per_row, 1)) // 16 * 16, 512))
    ts = max(16, (ts // 16) * 16)
    ts = min(ts, _round_up(S, 16))

    B_pad = _round_up(B, tb)
    S_pad = _round_up(S, ts)
    nb, ns = B_pad // tb, S_pad // ts

    # Only pad when the tile sizes do not divide the true shapes: an unconditional
    # jnp.pad would copy both (B,S,D) activations through HBM before the kernel.
    if B_pad == B and S_pad == S:
        h1p, h2p = h1, h2
    else:
        pad3 = lambda x: jnp.pad(x, ((0, B_pad - B), (0, S_pad - S), (0, 0)))
        h1p, h2p = pad3(h1), pad3(h2)

    labels_i32 = labels.astype(jnp.int32)
    if B_pad != B:
        labels_i32 = jnp.pad(labels_i32, (0, B_pad - B))
    labels2d = labels_i32.reshape(B_pad, 1)

    # Head parameters: pre-transposed / padded, f32, VMEM-resident across the grid.
    wdT = params["dense_w"].astype(jnp.float32).T                     # (D, D)
    bd = params["dense_b"].astype(jnp.float32).reshape(1, D)
    gamma = params["ln_g"].astype(jnp.float32).reshape(1, D)
    beta = params["ln_b"].astype(jnp.float32).reshape(1, D)
    wdecT = jnp.pad(params["dec_w"].astype(jnp.float32).T,
                    ((0, 0), (0, C_pad - C)))                         # (D, Cpad)
    cbias = jnp.pad(params["cbias"].astype(jnp.float32), (0, C_pad - C),
                    constant_values=_NEG_BIG).reshape(1, C_pad)

    kernel = functools.partial(
        scorer_kernel,
        inv_tokens=1.0 / (S - 1),
        last_local_idx=(S - 1) - (ns - 1) * ts,
    )

    # VMEM budget: 2 inputs x 2 buffers of the streaming tile + resident weights.
    block_in_bytes = tb * ts * D * itemsize
    param_bytes = (D * D + 3 * D + D * C_pad + C_pad) * 4
    out_bytes = (tb * C_pad + tb) * 4
    est = 4 * block_in_bytes + 2 * param_bytes + 4 * out_bytes + tb * D * 4 + (4 << 20)
    vmem_limit = int(min(max(est, 32 << 20), 64 << 20))

    const_map = lambda b, s: (0, 0)
    logits_p, nll = pl.pallas_call(
        kernel,
        out_shape=(jax.ShapeDtypeStruct((B_pad, C_pad), jnp.float32),
                   jax.ShapeDtypeStruct((B_pad, 1), jnp.float32)),
        grid_spec=pltpu.PrefetchScalarGridSpec(
            num_scalar_prefetch=0,
            grid=(nb, ns),
            in_specs=[
                pl.BlockSpec((tb, ts, D), lambda b, s: (b, s, 0)),    # h1 tile
                pl.BlockSpec((tb, ts, D), lambda b, s: (b, s, 0)),    # h2 tile
                pl.BlockSpec((tb, 1), lambda b, s: (b, 0)),           # labels
                pl.BlockSpec((D, D), const_map),                      # dense W^T
                pl.BlockSpec((1, D), const_map),                      # dense b
                pl.BlockSpec((1, D), const_map),                      # LN gamma
                pl.BlockSpec((1, D), const_map),                      # LN beta
                pl.BlockSpec((D, C_pad), const_map),                  # decoder W^T (padded)
                pl.BlockSpec((1, C_pad), const_map),                  # class bias (padded)
            ],
            out_specs=(
                pl.BlockSpec((tb, C_pad), lambda b, s: (b, 0)),       # logits
                pl.BlockSpec((tb, 1), lambda b, s: (b, 0)),           # per-example NLL
            ),
            scratch_shapes=[pltpu.VMEM((tb, D), jnp.float32)],
        ),
        compiler_params=pltpu.CompilerParams(
            dimension_semantics=("parallel", "arbitrary"),
            vmem_limit_bytes=vmem_limit,
        ),
    )(h1p, h2p, labels2d, wdT, bd, gamma, beta, wdecT, cbias)

    logits = logits_p[:B, :C]
    loss = jnp.mean(nll[:B, 0])     # F.cross_entropy(..., reduction='mean')
    return logits, loss


def reference_forward(h1, h2, labels, params):
    h1 = h1.astype(jnp.float32)
    h2 = h2.astype(jnp.float32)
    rep1 = jnp.mean(h1[:, 0:-1, :], axis=1)
    rep2 = jnp.mean(h2[:, 0:-1, :], axis=1)
    d = jnp.abs(rep1 - rep2)
    x = jnp.dot(d, params["dense_w"].T,
                precision=jax.lax.Precision.HIGHEST) + params["dense_b"]
    x = x * 0.5 * (1.0 + jax.lax.erf(x / math.sqrt(2.0)))
    mu = x.mean(-1, keepdims=True)
    var = ((x - mu) ** 2).mean(-1, keepdims=True)
    x = (x - mu) / jnp.sqrt(var + LN_EPS) * params["ln_g"] + params["ln_b"]
    logits = jnp.dot(x, params["dec_w"].T,
                     precision=jax.lax.Precision.HIGHEST) + params["cbias"]
    lse = jax.scipy.special.logsumexp(logits, axis=-1)
    picked = jnp.take_along_axis(logits, labels[:, None], axis=-1)[:, 0]
    return logits, jnp.mean(lse - picked)


if __name__ == "__main__":
    B, S, D, C = 16, 64, 256, 8   # batch, seq, d_model, num_classes

    key = jax.random.PRNGKey(0)
    k1, k2, k3, k4, k5 = jax.random.split(key, 5)

    # Stand-ins for encoder(input_ids, attention_mask).last_hidden_state.
    # Streamed in bf16 (halves HBM bytes of the dominant phase); accumulation is f32.
    h1 = jax.random.normal(k1, (B, S, D), dtype=jnp.float32).astype(jnp.bfloat16)
    h2 = jax.random.normal(k2, (B, S, D), dtype=jnp.float32).astype(jnp.bfloat16)
    labels = jax.random.randint(k3, (B,), 0, C, dtype=jnp.int32)

    # ScoreHead params, initialized per init_weights (normal std=0.02, zero bias,
    # LayerNorm weight=1 / bias=0, classifier bias param = zeros)
    params = {
        "dense_w": 0.02 * jax.random.normal(k4, (D, D), dtype=jnp.float32),
        "dense_b": jnp.zeros((D,), jnp.float32),
        "ln_g": jnp.ones((D,), jnp.float32),
        "ln_b": jnp.zeros((D,), jnp.float32),
        "dec_w": 0.02 * jax.random.normal(k5, (C, D), dtype=jnp.float32),
        "cbias": jnp.zeros((C,), jnp.float32),
    }

    # ts=32 -> grid (2, 2): exercises the B-parallel / S-reduction pipeline.
    fwd = jax.jit(functools.partial(scorer_forward, tb=8, ts=32))
    logits, loss = fwd(h1, h2, labels, params)
    jax.block_until_ready((logits, loss))

    ref_logits, ref_loss = reference_forward(h1, h2, labels, params)
    np.testing.assert_allclose(np.asarray(logits), np.asarray(ref_logits),
                               rtol=5e-3, atol=5e-3)
    np.testing.assert_allclose(float(loss), float(ref_loss), rtol=5e-3, atol=5e-3)

    print("KERNEL_OK")
</pallas_src>

<mosaic_0001>
module attributes {stable_mosaic.version = 11 : i64} {
  func.func @scorer_kernel(%arg0: i32, %arg1: i32, %arg2: memref<8x32x256xbf16, #tpu.memory_space<vmem>>, %arg3: memref<8x32x256xbf16, #tpu.memory_space<vmem>>, %arg4: memref<8x1xi32, #tpu.memory_space<vmem>>, %arg5: memref<256x256xf32, #tpu.memory_space<vmem>>, %arg6: memref<1x256xf32, #tpu.memory_space<vmem>>, %arg7: memref<1x256xf32, #tpu.memory_space<vmem>>, %arg8: memref<1x256xf32, #tpu.memory_space<vmem>>, %arg9: memref<256x128xf32, #tpu.memory_space<vmem>>, %arg10: memref<1x128xf32, #tpu.memory_space<vmem>>, %arg11: memref<8x128xf32, #tpu.memory_space<vmem>>, %arg12: memref<8x1xf32, #tpu.memory_space<vmem>>, %arg13: memref<8x256xf32, #tpu.memory_space<vmem>>) attributes {dimension_semantics = [#tpu.dimension_semantics<parallel>, #tpu.dimension_semantics<arbitrary>], iteration_bounds = array<i64: 2, 2>, scalar_prefetch = 0 : i64, scratch_operands = 1 : i64, tpu.core_type = #tpu.core_type<tc>, window_params = [{transform_indices = @transform_0, window_bounds = array<i64: 8, 32, 256>}, {transform_indices = @transform_1, window_bounds = array<i64: 8, 32, 256>}, {transform_indices = @transform_2, window_bounds = array<i64: 8, 1>}, {pipeline_mode = #tpu.pipeline_mode<synchronous>, transform_indices = @transform_3, window_bounds = array<i64: 256, 256>}, {pipeline_mode = #tpu.pipeline_mode<synchronous>, transform_indices = @transform_4, window_bounds = array<i64: 1, 256>}, {pipeline_mode = #tpu.pipeline_mode<synchronous>, transform_indices = @transform_5, window_bounds = array<i64: 1, 256>}, {pipeline_mode = #tpu.pipeline_mode<synchronous>, transform_indices = @transform_6, window_bounds = array<i64: 1, 256>}, {pipeline_mode = #tpu.pipeline_mode<synchronous>, transform_indices = @transform_7, window_bounds = array<i64: 256, 128>}, {pipeline_mode = #tpu.pipeline_mode<synchronous>, transform_indices = @transform_8, window_bounds = array<i64: 1, 128>}, {transform_indices = @transform_9, window_bounds = array<i64: 8, 128>}, {transform_indices = @transform_10, window_bounds = array<i64: 8, 1>}]} {
    %c0_i32 = arith.constant 0 : i32
    %0 = arith.cmpi eq, %arg1, %c0_i32 : i32
    %1 = arith.extui %0 : i1 to i32
    %c0_i32_0 = arith.constant 0 : i32
    %2 = arith.cmpi ne, %1, %c0_i32_0 : i32
    scf.if %2 {
      %cst_11 = arith.constant 0.000000e+00 : f32
      %15 = vector.broadcast %cst_11 : f32 to vector<8x256xf32>
      %c0_12 = arith.constant 0 : index
      %c0_13 = arith.constant 0 : index
      %16 = vector.load %arg13[%c0_12, %c0_13] : memref<8x256xf32, #tpu.memory_space<vmem>>, vector<8x256xf32>
      tpu.vector_store %arg13[%c0_12, %c0_13], %15 {strides = array<i32>} : memref<8x256xf32, #tpu.memory_space<vmem>>, vector<8x256xf32>,
    } else {
    }
    %c0 = arith.constant 0 : index
    %c0_1 = arith.constant 0 : index
    %c0_2 = arith.constant 0 : index
    %3 = vector.load %arg2[%c0, %c0_1, %c0_2] : memref<8x32x256xbf16, #tpu.memory_space<vmem>>, vector<8x32x256xbf16>
    %4 = arith.extf %3 : vector<8x32x256xbf16> to vector<8x32x256xf32>
    %c0_3 = arith.constant 0 : index
    %c0_4 = arith.constant 0 : index
    %c0_5 = arith.constant 0 : index
    %5 = vector.load %arg3[%c0_3, %c0_4, %c0_5] : memref<8x32x256xbf16, #tpu.memory_space<vmem>>, vector<8x32x256xbf16>
    %6 = arith.extf %5 : vector<8x32x256xbf16> to vector<8x32x256xf32>
    %7 = arith.subf %4, %6 : vector<8x32x256xf32>
    %c0_6 = arith.constant 0 : index
    %c0_7 = arith.constant 0 : index
    %8 = vector.load %arg13[%c0_6, %c0_7] : memref<8x256xf32, #tpu.memory_space<vmem>>, vector<8x256xf32>
    %cst = arith.constant dense<0.000000e+00> : vector<8x256xf32>
    %9 = vector.multi_reduction <add>, %7, %cst [1] : vector<8x32x256xf32> to vector<8x256xf32>
    %10 = arith.addf %8, %9 : vector<8x256xf32>
    %c0_8 = arith.constant 0 : index
    %c0_9 = arith.constant 0 : index
    %11 = vector.load %arg13[%c0_8, %c0_9] : memref<8x256xf32, #tpu.memory_space<vmem>>, vector<8x256xf32>
    tpu.vector_store %arg13[%c0_8, %c0_9], %10 {strides = array<i32>} : memref<8x256xf32, #tpu.memory_space<vmem>>, vector<8x256xf32>,
    %c1_i32 = arith.constant 1 : i32
    %12 = arith.cmpi eq, %arg1, %c1_i32 : i32
    %13 = arith.extui %12 : i1 to i32
    %c0_i32_10 = arith.constant 0 : i32
    %14 = arith.cmpi ne, %13, %c0_i32_10 : i32
    scf.if %14 {
      %c0_11 = arith.constant 0 : index
      %c31 = arith.constant 31 : index
      %c0_12 = arith.constant 0 : index
      %15 = vector.load %arg2[%c0_11, %c31, %c0_12] : memref<8x32x256xbf16, #tpu.memory_space<vmem>>, vector<8x1x256xbf16>
      %16 = vector.shape_cast %15 : vector<8x1x256xbf16> to vector<8x256xbf16>
      %17 = arith.extf %16 : vector<8x256xbf16> to vector<8x256xf32>
      %c0_13 = arith.constant 0 : index
      %c31_14 = arith.constant 31 : index
      %c0_15 = arith.constant 0 : index
      %18 = vector.load %arg3[%c0_13, %c31_14, %c0_15] : memref<8x32x256xbf16, #tpu.memory_space<vmem>>, vector<8x1x256xbf16>
      %19 = vector.shape_cast %18 : vector<8x1x256xbf16> to vector<8x256xbf16>
      %20 = arith.extf %19 : vector<8x256xbf16> to vector<8x256xf32>
      %21 = arith.subf %17, %20 : vector<8x256xf32>
      %c0_16 = arith.constant 0 : index
      %c0_17 = arith.constant 0 : index
      %22 = vector.load %arg13[%c0_16, %c0_17] : memref<8x256xf32, #tpu.memory_space<vmem>>, vector<8x256xf32>
      %23 = arith.subf %22, %21 : vector<8x256xf32>
      %cst_18 = arith.constant 0.0158730168 : f32
      %24 = vector.broadcast %cst_18 : f32 to vector<8x256xf32>
      %25 = arith.mulf %23, %24 : vector<8x256xf32>
      %26 = math.absf %25 : vector<8x256xf32>
      %c0_19 = arith.constant 0 : index
      %c0_20 = arith.constant 0 : index
      %27 = vector.load %arg5[%c0_19, %c0_20] : memref<256x256xf32, #tpu.memory_space<vmem>>, vector<256x256xf32>
      %cst_21 = arith.constant dense<0.000000e+00> : vector<8x256xf32>
      %28 = tpu.matmul %26, %27, %cst_21 {dimension_numbers = #tpu.dot_dimension_numbers<[1], [0], [0], [1], [0, 0, 1, 1], [], []>} : vector<8x256xf32>, vector<256x256xf32>, vector<8x256xf32> -> vector<8x256xf32>
      %c0_22 = arith.constant 0 : index
      %c0_23 = arith.constant 0 : index
      %29 = vector.load %arg6[%c0_22, %c0_23] : memref<1x256xf32, #tpu.memory_space<vmem>>, vector<1x256xf32>
      %30 = vector.broadcast %29 : vector<1x256xf32> to vector<8x256xf32>
      %31 = arith.addf %28, %30 : vector<8x256xf32>
      %cst_24 = arith.constant 5.000000e-01 : f32
      %32 = vector.broadcast %cst_24 : f32 to vector<8x256xf32>
      %33 = arith.mulf %31, %32 : vector<8x256xf32>
      %cst_25 = arith.constant 0.707106769 : f32
      %34 = vector.broadcast %cst_25 : f32 to vector<8x256xf32>
      %35 = arith.mulf %31, %34 : vector<8x256xf32>
      %36 = math.erf %35 : vector<8x256xf32>
      %cst_26 = arith.constant 1.000000e+00 : f32
      %37 = vector.broadcast %cst_26 : f32 to vector<8x256xf32>
      %38 = arith.addf %37, %36 : vector<8x256xf32>
      %39 = arith.mulf %33, %38 : vector<8x256xf32>
      %cst_27 = arith.constant dense<0.000000e+00> : vector<8xf32>
      %40 = vector.multi_reduction <add>, %39, %cst_27 [1] : vector<8x256xf32> to vector<8xf32>
      %41 = vector.shape_cast %40 : vector<8xf32> to vector<8x1xf32>
      %cst_28 = arith.constant 2.560000e+02 : f32
      %42 = vector.broadcast %cst_28 : f32 to vector<8x1xf32>
      %43 = arith.divf %41, %42 : vector<8x1xf32>
      %44 = vector.broadcast %43 : vector<8x1xf32> to vector<8x256xf32>
      %45 = arith.subf %39, %44 : vector<8x256xf32>
      %46 = vector.broadcast %43 : vector<8x1xf32> to vector<8x256xf32>
      %47 = arith.subf %39, %46 : vector<8x256xf32>
      %48 = arith.mulf %45, %47 : vector<8x256xf32>
      %cst_29 = arith.constant dense<0.000000e+00> : vector<8xf32>
      %49 = vector.multi_reduction <add>, %48, %cst_29 [1] : vector<8x256xf32> to vector<8xf32>
      %50 = vector.shape_cast %49 : vector<8xf32> to vector<8x1xf32>
      %cst_30 = arith.constant 2.560000e+02 : f32
      %51 = vector.broadcast %cst_30 : f32 to vector<8x1xf32>
      %52 = arith.divf %50, %51 : vector<8x1xf32>
      %53 = vector.broadcast %43 : vector<8x1xf32> to vector<8x256xf32>
      %54 = arith.subf %39, %53 : vector<8x256xf32>
      %cst_31 = arith.constant 9.99999974E-6 : f32
      %55 = vector.broadcast %cst_31 : f32 to vector<8x1xf32>
      %56 = arith.addf %52, %55 : vector<8x1xf32>
      %57 = math.rsqrt %56 : vector<8x1xf32>
      %58 = vector.broadcast %57 : vector<8x1xf32> to vector<8x256xf32>
      %59 = arith.mulf %54, %58 : vector<8x256xf32>
      %c0_32 = arith.constant 0 : index
      %c0_33 = arith.constant 0 : index
      %60 = vector.load %arg7[%c0_32, %c0_33] : memref<1x256xf32, #tpu.memory_space<vmem>>, vector<1x256xf32>
      %61 = vector.broadcast %60 : vector<1x256xf32> to vector<8x256xf32>
      %62 = arith.mulf %59, %61 : vector<8x256xf32>
      %c0_34 = arith.constant 0 : index
      %c0_35 = arith.constant 0 : index
      %63 = vector.load %arg8[%c0_34, %c0_35] : memref<1x256xf32, #tpu.memory_space<vmem>>, vector<1x256xf32>
      %64 = vector.broadcast %63 : vector<1x256xf32> to vector<8x256xf32>
      %65 = arith.addf %62, %64 : vector<8x256xf32>
      %c0_36 = arith.constant 0 : index
      %c0_37 = arith.constant 0 : index
      %66 = vector.load %arg9[%c0_36, %c0_37] : memref<256x128xf32, #tpu.memory_space<vmem>>, vector<256x128xf32>
      %cst_38 = arith.constant dense<0.000000e+00> : vector<8x128xf32>
      %67 = tpu.matmul %65, %66, %cst_38 {dimension_numbers = #tpu.dot_dimension_numbers<[1], [0], [0], [1], [0, 0, 1, 1], [], []>} : vector<8x256xf32>, vector<256x128xf32>, vector<8x128xf32> -> vector<8x128xf32>
      %c0_39 = arith.constant 0 : index
      %c0_40 = arith.constant 0 : index
      %68 = vector.load %arg10[%c0_39, %c0_40] : memref<1x128xf32, #tpu.memory_space<vmem>>, vector<1x128xf32>
      %69 = vector.broadcast %68 : vector<1x128xf32> to vector<8x128xf32>
      %70 = arith.addf %67, %69 : vector<8x128xf32>
      %c0_41 = arith.constant 0 : index
      %c0_42 = arith.constant 0 : index
      %71 = vector.load %arg11[%c0_41, %c0_42] : memref<8x128xf32, #tpu.memory_space<vmem>>, vector<8x128xf32>
      tpu.vector_store %arg11[%c0_41, %c0_42], %70 {strides = array<i32>} : memref<8x128xf32, #tpu.memory_space<vmem>>, vector<8x128xf32>,
      %cst_43 = arith.constant dense<0xFF800000> : vector<8xf32>
      %72 = vector.multi_reduction <maximumf>, %70, %cst_43 [1] : vector<8x128xf32> to vector<8xf32>
      %73 = vector.shape_cast %72 : vector<8xf32> to vector<8x1xf32>
      %74 = vector.broadcast %73 : vector<8x1xf32> to vector<8x128xf32>
      %75 = arith.subf %70, %74 : vector<8x128xf32>
      %76 = math.exp %75 : vector<8x128xf32>
      %cst_44 = arith.constant dense<0.000000e+00> : vector<8xf32>
      %77 = vector.multi_reduction <add>, %76, %cst_44 [1] : vector<8x128xf32> to vector<8xf32>
      %78 = vector.shape_cast %77 : vector<8xf32> to vector<8x1xf32>
      %79 = math.log %78 : vector<8x1xf32>
      %80 = arith.addf %73, %79 : vector<8x1xf32>
      %81 = tpu.iota {dimensions = array<i32: 1>} : vector<8x128xi32>
      %c0_45 = arith.constant 0 : index
      %c0_46 = arith.constant 0 : index
      %82 = vector.load %arg4[%c0_45, %c0_46] : memref<8x1xi32, #tpu.memory_space<vmem>>, vector<8x1xi32>
      %83 = vector.broadcast %82 : vector<8x1xi32> to vector<8x128xi32>
      %84 = arith.cmpi eq, %81, %83 : vector<8x128xi32>
      %85 = arith.extui %84 : vector<8x128xi1> to vector<8x128xi32>
      %86 = arith.sitofp %85 : vector<8x128xi32> to vector<8x128xf32>
      %87 = arith.mulf %70, %86 : vector<8x128xf32>
      %cst_47 = arith.constant dense<0.000000e+00> : vector<8xf32>
      %88 = vector.multi_reduction <add>, %87, %cst_47 [1] : vector<8x128xf32> to vector<8xf32>
      %89 = vector.shape_cast %88 : vector<8xf32> to vector<8x1xf32>
      %90 = arith.subf %80, %89 : vector<8x1xf32>
      %c0_48 = arith.constant 0 : index
      %c0_49 = arith.constant 0 : index
      %91 = vector.load %arg12[%c0_48, %c0_49] : memref<8x1xf32, #tpu.memory_space<vmem>>, vector<8x1xf32>
      tpu.vector_store %arg12[%c0_48, %c0_49], %90 {strides = array<i32>} : memref<8x1xf32, #tpu.memory_space<vmem>>, vector<8x1xf32>,
    } else {
    }
    return
  }
  func.func @transform_0(%arg0: i32, %arg1: i32) -> (i32, i32, i32) {
    %c0_i32 = arith.constant 0 : i32
    %c0_i32_0 = arith.constant 0 : i32
    return %arg0, %arg1, %c0_i32 : i32, i32, i32
  }
  func.func @transform_1(%arg0: i32, %arg1: i32) -> (i32, i32, i32) {
    %c0_i32 = arith.constant 0 : i32
    %c0_i32_0 = arith.constant 0 : i32
    return %arg0, %arg1, %c0_i32 : i32, i32, i32
  }
  func.func @transform_2(%arg0: i32, %arg1: i32) -> (i32, i32) {
    %c0_i32 = arith.constant 0 : i32
    %c0_i32_0 = arith.constant 0 : i32
    return %arg0, %c0_i32 : i32, i32
  }
  func.func @transform_3(%arg0: i32, %arg1: i32) -> (i32, i32) {
    %c0_i32 = arith.constant 0 : i32
    %c0_i32_0 = arith.constant 0 : i32
    %c0_i32_1 = arith.constant 0 : i32
    return %c0_i32, %c0_i32_0 : i32, i32
  }
  func.func @transform_4(%arg0: i32, %arg1: i32) -> (i32, i32) {
    %c0_i32 = arith.constant 0 : i32
    %c0_i32_0 = arith.constant 0 : i32
    %c0_i32_1 = arith.constant 0 : i32
    return %c0_i32, %c0_i32_0 : i32, i32
  }
  func.func @transform_5(%arg0: i32, %arg1: i32) -> (i32, i32) {
    %c0_i32 = arith.constant 0 : i32
    %c0_i32_0 = arith.constant 0 : i32
    %c0_i32_1 = arith.constant 0 : i32
    return %c0_i32, %c0_i32_0 : i32, i32
  }
  func.func @transform_6(%arg0: i32, %arg1: i32) -> (i32, i32) {
    %c0_i32 = arith.constant 0 : i32
    %c0_i32_0 = arith.constant 0 : i32
    %c0_i32_1 = arith.constant 0 : i32
    return %c0_i32, %c0_i32_0 : i32, i32
  }
  func.func @transform_7(%arg0: i32, %arg1: i32) -> (i32, i32) {
    %c0_i32 = arith.constant 0 : i32
    %c0_i32_0 = arith.constant 0 : i32
    %c0_i32_1 = arith.constant 0 : i32
    return %c0_i32, %c0_i32_0 : i32, i32
  }
  func.func @transform_8(%arg0: i32, %arg1: i32) -> (i32, i32) {
    %c0_i32 = arith.constant 0 : i32
    %c0_i32_0 = arith.constant 0 : i32
    %c0_i32_1 = arith.constant 0 : i32
    return %c0_i32, %c0_i32_0 : i32, i32
  }
  func.func @transform_9(%arg0: i32, %arg1: i32) -> (i32, i32) {
    %c0_i32 = arith.constant 0 : i32
    %c0_i32_0 = arith.constant 0 : i32
    return %arg0, %c0_i32 : i32, i32
  }
  func.func @transform_10(%arg0: i32, %arg1: i32) -> (i32, i32) {
    %c0_i32 = arith.constant 0 : i32
    %c0_i32_0 = arith.constant 0 : i32
    return %arg0, %c0_i32 : i32, i32
  }
}

</mosaic_0001>

<llo_original>
// kernel: scorer_forward.1
$region0: #{scorer_forward.1}
  #allocation0 [shape = 'u32[]', space=smem, size = 0x4, offset = 0x4, fixed_abs, tag = 'smem constant byte address 0x4 - core index']
  #allocation1 [shape = 'u32[144,128]{1,0:T(1,128)}', space=vmem, size = 0x12000, scoped, tag = 'internal scratch']
  #allocation2 [shape = 'f32[8,256]{1,0:T(8,128)}', space=vmem, size = 0x2000, scoped, tag = 'scratch operand']
  #allocation6 [shape = 's32[]', space=sflag, size = 0x4, offset = 0, fixed_abs, tag = 'sflag constant byte address 0x0 - dummy sync flag']
  %s0 = inlined_call_operand.vmem [shape: bf16[16,64,256], index: 0, kind: input, shape index: {}]
  %s1 = inlined_call_operand.hbm [shape: bf16[16,64,256], index: 1, kind: input, shape index: {}]
  %s2 = inlined_call_operand.vmem [shape: s32[16,1], index: 2, kind: input, shape index: {}]
  %s3 = inlined_call_operand.vmem [shape: f32[256,256], index: 3, kind: input, shape index: {}]
  %s4 = inlined_call_operand.vmem [shape: f32[1,256], index: 4, kind: input, shape index: {}]
  %s5 = inlined_call_operand.vmem [shape: f32[1,256], index: 5, kind: input, shape index: {}]
  %s6 = inlined_call_operand.vmem [shape: f32[1,256], index: 6, kind: input, shape index: {}]
  %s7 = inlined_call_operand.vmem [shape: f32[256,128], index: 7, kind: input, shape index: {}]
  %s8 = inlined_call_operand.vmem [shape: f32[1,128], index: 8, kind: input, shape index: {}]
  %s9 = inlined_call_operand.vmem [shape: f32[16,128], index: 9, kind: output, shape index: {0}]
  %s10 = inlined_call_operand.vmem [shape: f32[16,1], index: 10, kind: output, shape index: {1}]
  %11 = xla_tuple %s9, %s10
  %s12 = sld [smem:[#allocation0]]
  $region127: #{scorer_forward.1} parent=0
    _
  %s14 = ssub.s32 1, %s12
  %s15 = scalar_select 0, %s14, %s12
  $region1: #{scorer_forward.1} parent=0
    #allocation3 [shape = 'u8[262144]{0}', space=vmem, size = 0x40000, scoped, tag = 'input window, operand 0']
    #allocation4 [shape = 'u8[262144]{0}', space=vmem, size = 0x40000, scoped, tag = 'input window, operand 1']
    #allocation5 [shape = 's32[2]{0}', space=sflag, size = 0x8, scoped, tag = 'scoped memory for scorer_forward.1']
    %16 = vsyncpa [#allocation5], 0
    %s17 = scalar_lea.sflag [#allocation5], 1
    %18 = vsyncpa %s17, 0
    loop: start=0, step=1, limit=6
    $region2: #{scorer_forward.1} parent=1 // loop_pre_header
      _
    $region3: #{scorer_forward.1} parent=1 // loop_header
      %s20 = sphi 0, %s24
      %p21 = scmp.ge.s32.totalorder %s20, 6
      %s27 = sphi 0, %s39
      %s28 = sphi 0, %s35
      %s29 = sphi 0, %s27
      %s30 = sphi 0, %s28
      %s31 = sphi 0, %s29
      %s32 = sphi 0, %s30
      %s44 = sphi 0, %s46
      %s47 = sphi 0, %s44
      %s48 = sphi 0, %s47
      %s64 = sphi 0, %s48
      %s72 = sphi 0, %s74
      %s75 = sphi 0, %s72
      %s76 = sphi 0, %s75
      %s92 = sphi 0, %s76
      %s98 = sphi 0, %s100
      %s101 = sphi 0, %s98
      %s102 = sphi 0, %s101
      %s118 = sphi 0, %s102
      %s122 = sphi 0, %s122
      %s124 = sphi 0, %s122
      %s125 = sphi 0, %s124
      %s139 = sphi 0, %s125
      %s143 = sphi 0, %s143
      %s145 = sphi 0, %s143
      %s146 = sphi 0, %s145
      %s160 = sphi 0, %s146
      %s164 = sphi 0, %s164
      %s166 = sphi 0, %s164
      %s167 = sphi 0, %s166
      %s181 = sphi 0, %s167
      %s185 = sphi 0, %s185
      %s187 = sphi 0, %s185
      %s188 = sphi 0, %s187
      %s202 = sphi 0, %s188
      %s206 = sphi 0, %s206
      %s208 = sphi 0, %s206
      %s209 = sphi 0, %s208
      %s223 = sphi 0, %s209
      %s227 = sphi 0, %s227
      %s229 = sphi 0, %s227
      %s230 = sphi 0, %s229
      %s244 = sphi 0, %s230
      %s250 = sphi 0, %s252
      %s253 = sphi 0, %s250
      %s254 = sphi 0, %s253
      %s270 = sphi 0, %s254
      %s276 = sphi 0, %s278
      %s279 = sphi 0, %s276
      %s280 = sphi 0, %s279
      %s296 = sphi 0, %s280
    $region4: #{scorer_forward.1} parent=1 // loop_header_branch
      %23 = sbr.rel (%p21) target = $region8
    $region5: #{scorer_forward.1} parent=1 // loop_body
      %s25 = ssub.s32 %s20, 1
      %s26 = ssub.s32 %s20, 2
      %s33 = sadd.s32 1, %s28
      %p34 = scmp.ge.s32.totalorder %s33, 2
      %s35 = scalar_select %p34, 0, %s33
      %s36 = sadd.s32 1, %s27
      %s37 = scalar_select %p34, %s36, %s27
      %p38 = scmp.ge.s32.totalorder %s37, 2
      %s39 = scalar_select %p38, 0, %s37
      %s40 = ssub.s32 %s27, %s39
      %s41 = ssub.s32 %s28, %s35
      %s42 = sor.u32 %s40, %s41
      %p43 = scmp.eq.s32.totalorder %s42, 0
      %s45 = sadd.s32 %s44, 1
      %s46 = scalar_select %p43, %s44, %s45
      %p49 = pneg %p43
      %p50 = scmp.eq.s32.totalorder %s20, 3
      %p51 = por %p49, %p50
      %p52 = scmp.ne.s32.totalorder %s44, %s47
      %p53 = scmp.eq.s32.totalorder %s20, 0
      %p54 = por %p52, %p53
      %p55 = scmp.ne.s32.totalorder %s44, %s47
      %p56 = scmp.eq.s32.totalorder %s25, 3
      %p57 = por %p55, %p56
      %p58 = scmp.ne.s32.totalorder %s47, %s48
      %p59 = scmp.eq.s32.totalorder %s25, 0
      %p60 = por %p58, %p59
      %p61 = scmp.ne.s32.totalorder %s47, %s48
      %p62 = scmp.eq.s32.totalorder %s26, 3
      %p63 = por %p61, %p62
      %p65 = scmp.ne.s32.totalorder %s48, %s64
      %p66 = scmp.eq.s32.totalorder %s26, 0
      %p67 = por %p65, %p66
      %s68 = ssub.s32 %s27, %s39
      %s69 = ssub.s32 %s28, %s35
      %s70 = sor.u32 %s68, %s69
      %p71 = scmp.eq.s32.totalorder %s70, 0
      %s73 = sadd.s32 %s72, 1
      %s74 = scalar_select %p71, %s72, %s73
      %p77 = pneg %p71
      %p78 = scmp.eq.s32.totalorder %s20, 3
      %p79 = por %p77, %p78
      %p80 = scmp.ne.s32.totalorder %s72, %s75
      %p81 = scmp.eq.s32.totalorder %s20, 0
      %p82 = por %p80, %p81
      %p83 = scmp.ne.s32.totalorder %s72, %s75
      %p84 = scmp.eq.s32.totalorder %s25, 3
      %p85 = por %p83, %p84
      %p86 = scmp.ne.s32.totalorder %s75, %s76
      %p87 = scmp.eq.s32.totalorder %s25, 0
      %p88 = por %p86, %p87
      %p89 = scmp.ne.s32.totalorder %s75, %s76
      %p90 = scmp.eq.s32.totalorder %s26, 3
      %p91 = por %p89, %p90
      %p93 = scmp.ne.s32.totalorder %s76, %s92
      %p94 = scmp.eq.s32.totalorder %s26, 0
      %p95 = por %p93, %p94
      %s96 = ssub.s32 %s27, %s39
      %p97 = scmp.eq.s32.totalorder %s96, 0
      %s99 = sadd.s32 %s98, 1
      %s100 = scalar_select %p97, %s98, %s99
      %p103 = pneg %p97
      %p104 = scmp.eq.s32.totalorder %s20, 3
      %p105 = por %p103, %p104
      %p106 = scmp.ne.s32.totalorder %s98, %s101
      %p107 = scmp.eq.s32.totalorder %s20, 0
      %p108 = por %p106, %p107
      %p109 = scmp.ne.s32.totalorder %s98, %s101
      %p110 = scmp.eq.s32.totalorder %s25, 3
      %p111 = por %p109, %p110
      %p112 = scmp.ne.s32.totalorder %s101, %s102
      %p113 = scmp.eq.s32.totalorder %s25, 0
      %p114 = por %p112, %p113
      %p115 = scmp.ne.s32.totalorder %s101, %s102
      %p116 = scmp.eq.s32.totalorder %s26, 3
      %p117 = por %p115, %p116
      %p119 = scmp.ne.s32.totalorder %s102, %s118
      %p120 = scmp.eq.s32.totalorder %s26, 0
      %p121 = por %p119, %p120
      %s123 = sadd.s32 %s122, 1
      %p126 = scmp.eq.s32.totalorder %s20, 3
      %p127 = scmp.ne.s32.totalorder %s122, %s124
      %p128 = scmp.eq.s32.totalorder %s20, 0
      %p129 = por %p127, %p128
      %p130 = scmp.ne.s32.totalorder %s122, %s124
      %p131 = scmp.eq.s32.totalorder %s25, 3
      %p132 = por %p130, %p131
      %p133 = scmp.ne.s32.totalorder %s124, %s125
      %p134 = scmp.eq.s32.totalorder %s25, 0
      %p135 = por %p133, %p134
      %p136 = scmp.ne.s32.totalorder %s124, %s125
      %p137 = scmp.eq.s32.totalorder %s26, 3
      %p138 = por %p136, %p137
      %p140 = scmp.ne.s32.totalorder %s125, %s139
      %p141 = scmp.eq.s32.totalorder %s26, 0
      %p142 = por %p140, %p141
      %s144 = sadd.s32 %s143, 1
      %p147 = scmp.eq.s32.totalorder %s20, 3
      %p148 = scmp.ne.s32.totalorder %s143, %s145
      %p149 = scmp.eq.s32.totalorder %s20, 0
      %p150 = por %p148, %p149
      %p151 = scmp.ne.s32.totalorder %s143, %s145
      %p152 = scmp.eq.s32.totalorder %s25, 3
      %p153 = por %p151, %p152
      %p154 = scmp.ne.s32.totalorder %s145, %s146
      %p155 = scmp.eq.s32.totalorder %s25, 0
      %p156 = por %p154, %p155
      %p157 = scmp.ne.s32.totalorder %s145, %s146
      %p158 = scmp.eq.s32.totalorder %s26, 3
      %p159 = por %p157, %p158
      %p161 = scmp.ne.s32.totalorder %s146, %s160
      %p162 = scmp.eq.s32.totalorder %s26, 0
      %p163 = por %p161, %p162
      %s165 = sadd.s32 %s164, 1
      %p168 = scmp.eq.s32.totalorder %s20, 3
      %p169 = scmp.ne.s32.totalorder %s164, %s166
      %p170 = scmp.eq.s32.totalorder %s20, 0
      %p171 = por %p169, %p170
      %p172 = scmp.ne.s32.totalorder %s164, %s166
      %p173 = scmp.eq.s32.totalorder %s25, 3
      %p174 = por %p172, %p173
      %p175 = scmp.ne.s32.totalorder %s166, %s167
      %p176 = scmp.eq.s32.totalorder %s25, 0
      %p177 = por %p175, %p176
      %p178 = scmp.ne.s32.totalorder %s166, %s167
      %p179 = scmp.eq.s32.totalorder %s26, 3
      %p180 = por %p178, %p179
      %p182 = scmp.ne.s32.totalorder %s167, %s181
      %p183 = scmp.eq.s32.totalorder %s26, 0
      %p184 = por %p182, %p183
      %s186 = sadd.s32 %s185, 1
      %p189 = scmp.eq.s32.totalorder %s20, 3
      %p190 = scmp.ne.s32.totalorder %s185, %s187
      %p191 = scmp.eq.s32.totalorder %s20, 0
      %p192 = por %p190, %p191
      %p193 = scmp.ne.s32.totalorder %s185, %s187
      %p194 = scmp.eq.s32.totalorder %s25, 3
      %p195 = por %p193, %p194
      %p196 = scmp.ne.s32.totalorder %s187, %s188
      %p197 = scmp.eq.s32.totalorder %s25, 0
      %p198 = por %p196, %p197
      %p199 = scmp.ne.s32.totalorder %s187, %s188
      %p200 = scmp.eq.s32.totalorder %s26, 3
      %p201 = por %p199, %p200
      %p203 = scmp.ne.s32.totalorder %s188, %s202
      %p204 = scmp.eq.s32.totalorder %s26, 0
      %p205 = por %p203, %p204
      %s207 = sadd.s32 %s206, 1
      %p210 = scmp.eq.s32.totalorder %s20, 3
      %p211 = scmp.ne.s32.totalorder %s206, %s208
      %p212 = scmp.eq.s32.totalorder %s20, 0
      %p213 = por %p211, %p212
      %p214 = scmp.ne.s32.totalorder %s206, %s208
      %p215 = scmp.eq.s32.totalorder %s25, 3
      %p216 = por %p214, %p215
      %p217 = scmp.ne.s32.totalorder %s208, %s209
      %p218 = scmp.eq.s32.totalorder %s25, 0
      %p219 = por %p217, %p218
      %p220 = scmp.ne.s32.totalorder %s208, %s209
      %p221 = scmp.eq.s32.totalorder %s26, 3
      %p222 = por %p220, %p221
      %p224 = scmp.ne.s32.totalorder %s209, %s223
      %p225 = scmp.eq.s32.totalorder %s26, 0
      %p226 = por %p224, %p225
      %s228 = sadd.s32 %s227, 1
      %p231 = scmp.eq.s32.totalorder %s20, 3
      %p232 = scmp.ne.s32.totalorder %s227, %s229
      %p233 = scmp.eq.s32.totalorder %s20, 0
      %p234 = por %p232, %p233
      %p235 = scmp.ne.s32.totalorder %s227, %s229
      %p236 = scmp.eq.s32.totalorder %s25, 3
      %p237 = por %p235, %p236
      %p238 = scmp.ne.s32.totalorder %s229, %s230
      %p239 = scmp.eq.s32.totalorder %s25, 0
      %p240 = por %p238, %p239
      %p241 = scmp.ne.s32.totalorder %s229, %s230
      %p242 = scmp.eq.s32.totalorder %s26, 3
      %p243 = por %p241, %p242
      %p245 = scmp.ne.s32.totalorder %s230, %s244
      %p246 = scmp.eq.s32.totalorder %s26, 0
      %p247 = por %p245, %p246
      %s248 = ssub.s32 %s27, %s39
      %p249 = scmp.eq.s32.totalorder %s248, 0
      %s251 = sadd.s32 %s250, 1
      %s252 = scalar_select %p249, %s250, %s251
      %p255 = pneg %p249
      %p256 = scmp.eq.s32.totalorder %s20, 3
      %p257 = por %p255, %p256
      %p258 = scmp.ne.s32.totalorder %s250, %s253
      %p259 = scmp.eq.s32.totalorder %s20, 0
      %p260 = por %p258, %p259
      %p261 = scmp.ne.s32.totalorder %s250, %s253
      %p262 = scmp.eq.s32.totalorder %s25, 3
      %p263 = por %p261, %p262
      %p264 = scmp.ne.s32.totalorder %s253, %s254
      %p265 = scmp.eq.s32.totalorder %s25, 0
      %p266 = por %p264, %p265
      %p267 = scmp.ne.s32.totalorder %s253, %s254
      %p268 = scmp.eq.s32.totalorder %s26, 3
      %p269 = por %p267, %p268
      %p271 = scmp.ne.s32.totalorder %s254, %s270
      %p272 = scmp.eq.s32.totalorder %s26, 0
      %p273 = por %p271, %p272
      %s274 = ssub.s32 %s27, %s39
      %p275 = scmp.eq.s32.totalorder %s274, 0
      %s277 = sadd.s32 %s276, 1
      %s278 = scalar_select %p275, %s276, %s277
      %p281 = pneg %p275
      %p282 = scmp.eq.s32.totalorder %s20, 3
      %p283 = por %p281, %p282
      %p284 = scmp.ne.s32.totalorder %s276, %s279
      %p285 = scmp.eq.s32.totalorder %s20, 0
      %p286 = por %p284, %p285
      %p287 = scmp.ne.s32.totalorder %s276, %s279
      %p288 = scmp.eq.s32.totalorder %s25, 3
      %p289 = por %p287, %p288
      %p290 = scmp.ne.s32.totalorder %s279, %s280
      %p291 = scmp.eq.s32.totalorder %s25, 0
      %p292 = por %p290, %p291
      %p293 = scmp.ne.s32.totalorder %s279, %s280
      %p294 = scmp.eq.s32.totalorder %s26, 3
      %p295 = por %p293, %p294
      %p297 = scmp.ne.s32.totalorder %s280, %s296
      %p298 = scmp.eq.s32.totalorder %s26, 0
      %p299 = por %p297, %p298
      %p300 = scmp.le.s32.totalorder 1, %s20
      %p301 = scmp.lt.s32.totalorder %s20, 5
      %p302 = pnand %p300, %p301
      %p303 = pneg %p302
      // Predicated region
      $region9: #{scorer_forward.1} parent=5 // pred_check
        _
      $region10: #{scorer_forward.1} parent=5 // pred_check_branch
        %305 = sbr.rel (%p302) target = $region12
      $region11: #{scorer_forward.1} parent=5 // pred_region
        %s306 = ssub.s32 %s20, 1
        // Predicated region
        $region13: #{scorer_forward.1} parent=11 // pred_check
          %p307 = pneg %p135
        $region14: #{scorer_forward.1} parent=11 // pred_check_branch
          %309 = sbr.rel (%p307) target = $region16
        $region15: #{scorer_forward.1} parent=11 // pred_region
          _
        $region16: #{scorer_forward.1} parent=11 // pred_fallthru
          _
        // Predicated region
        $region17: #{scorer_forward.1} parent=11 // pred_check
          %p310 = pneg %p156
        $region18: #{scorer_forward.1} parent=11 // pred_check_branch
          %312 = sbr.rel (%p310) target = $region20
        $region19: #{scorer_forward.1} parent=11 // pred_region
          _
        $region20: #{scorer_forward.1} parent=11 // pred_fallthru
          _
        // Predicated region
        $region21: #{scorer_forward.1} parent=11 // pred_check
          %p313 = pneg %p177
        $region22: #{scorer_forward.1} parent=11 // pred_check_branch
          %315 = sbr.rel (%p313) target = $region24
        $region23: #{scorer_forward.1} parent=11 // pred_region
          _
        $region24: #{scorer_forward.1} parent=11 // pred_fallthru
          _
        // Predicated region
        $region25: #{scorer_forward.1} parent=11 // pred_check
          %p316 = pneg %p198
        $region26: #{scorer_forward.1} parent=11 // pred_check_branch
          %318 = sbr.rel (%p316) target = $region28
        $region27: #{scorer_forward.1} parent=11 // pred_region
          _
        $region28: #{scorer_forward.1} parent=11 // pred_fallthru
          _
        // Predicated region
        $region29: #{scorer_forward.1} parent=11 // pred_check
          %p319 = pneg %p219
        $region30: #{scorer_forward.1} parent=11 // pred_check_branch
          %321 = sbr.rel (%p319) target = $region32
        $region31: #{scorer_forward.1} parent=11 // pred_region
          _
        $region32: #{scorer_forward.1} parent=11 // pred_fallthru
          _
        // Predicated region
        $region33: #{scorer_forward.1} parent=11 // pred_check
          %p322 = pneg %p240
        $region34: #{scorer_forward.1} parent=11 // pred_check_branch
          %324 = sbr.rel (%p322) target = $region36
        $region35: #{scorer_forward.1} parent=11 // pred_region
          _
        $region36: #{scorer_forward.1} parent=11 // pred_fallthru
          _
      $region12: #{scorer_forward.1} parent=5 // pred_fallthru
        _
      %p325 = scmp.lt.s32.totalorder %s20, 4
      // Predicated region
      $region37: #{scorer_forward.1} parent=5 // pred_check
        %p326 = pneg %p325
      $region38: #{scorer_forward.1} parent=5 // pred_check_branch
        %328 = sbr.rel (%p326) target = $region40
      $region39: #{scorer_forward.1} parent=5 // pred_region
        // Predicated region
        $region41: #{scorer_forward.1} parent=39 // pred_check
          %p329 = pneg %p54
        $region42: #{scorer_forward.1} parent=39 // pred_check_branch
          %331 = sbr.rel (%p329) target = $region44
        $region43: #{scorer_forward.1} parent=39 // pred_region
          %s332 = sand.u32 %s44, 1
          %s333 = sand.u32 %s44, 1
          %s334 = smul.addr %s333, 256
          %s335 = scalar_lea.vmem [#allocation3], %s334
          %s336 = smul.u32 8, %s27
          %s337 = smul.u32 4, %s28
          %s338 = smul.addr %s337, 2
          %s339 = smul.addr %s336, 16
          %s340 = sadd.s32 %s338, %s339
          %s341 = smul.addr %s340, 4
          %s342 = scalar_lea.vmem %s0, %s341
          // Predicated region
          $region45: #{scorer_forward.1} parent=43 // pred_check
            _
          $region46: #{scorer_forward.1} parent=43 // pred_check_branch
            %344 = sbr.rel (0) target = $region48
          $region47: #{scorer_forward.1} parent=43 // pred_region
            // Predicated region
            $region49: #{scorer_forward.1} parent=47 // pred_check
              _
            $region50: #{scorer_forward.1} parent=47 // pred_check_branch
              %346 = sbr.rel (0) target = $region52
            $region51: #{scorer_forward.1} parent=47 // pred_region
              // Predicated region
              $region64: #{scorer_forward.1} parent=51 // pred_check
                _
              $region65: #{scorer_forward.1} parent=51 // pred_check_branch
                %423 = sbr.rel (0) target = $region67
              $region66: #{scorer_forward.1} parent=51 // pred_region
                loop: start=0, step=1, limit=1
                $region68: #{scorer_forward.1} parent=66 // loop_pre_header
                  _
                $region69: #{scorer_forward.1} parent=66 // loop_header
                  %s425 = sphi 0, %s429
                  %p426 = scmp.ge.s32.totalorder %s425, 1
                  %s430 = sphi %s342, %s342
                  %s431 = sphi %s335, %s335
                $region70: #{scorer_forward.1} parent=66 // loop_header_branch
                  %428 = sbr.rel (%p426) target = $region74
                $region71: #{scorer_forward.1} parent=66 // loop_body
                  %v432 = vld [vmem:[%s430] sm:$0xff]
                  %433 = vst [vmem:[%s431] sm:$0xff] %v432
                  %v434 = vld [vmem:[%s430 + $0x8] sm:$0xff]
                  %435 = vst [vmem:[%s431 + $0x8] sm:$0xff] %v434
                  %v436 = vld [vmem:[%s430 + $0x10] sm:$0xff]
                  %437 = vst [vmem:[%s431 + $0x10] sm:$0xff] %v436
                  %v438 = vld [vmem:[%s430 + $0x18] sm:$0xff]
                  %439 = vst [vmem:[%s431 + $0x18] sm:$0xff] %v438
                  %v440 = vld [vmem:[%s430 + $0x40] sm:$0xff]
                  %441 = vst [vmem:[%s431 + $0x20] sm:$0xff] %v440
                  %v442 = vld [vmem:[%s430 + $0x48] sm:$0xff]
                  %443 = vst [vmem:[%s431 + $0x28] sm:$0xff] %v442
                  %v444 = vld [vmem:[%s430 + $0x50] sm:$0xff]
                  %445 = vst [vmem:[%s431 + $0x30] sm:$0xff] %v444
                  %v446 = vld [vmem:[%s430 + $0x58] sm:$0xff]
                  %447 = vst [vmem:[%s431 + $0x38] sm:$0xff] %v446
                  %v448 = vld [vmem:[%s430 + $0x80] sm:$0xff]
                  %449 = vst [vmem:[%s431 + $0x40] sm:$0xff] %v448
                  %v450 = vld [vmem:[%s430 + $0x88] sm:$0xff]
                  %451 = vst [vmem:[%s431 + $0x48] sm:$0xff] %v450
                  %v452 = vld [vmem:[%s430 + $0x90] sm:$0xff]
                  %453 = vst [vmem:[%s431 + $0x50] sm:$0xff] %v452
                  %v454 = vld [vmem:[%s430 + $0x98] sm:$0xff]
                  %455 = vst [vmem:[%s431 + $0x58] sm:$0xff] %v454
                  %v456 = vld [vmem:[%s430 + $0xc0] sm:$0xff]
                  %457 = vst [vmem:[%s431 + $0x60] sm:$0xff] %v456
                  %v458 = vld [vmem:[%s430 + $0xc8] sm:$0xff]
                  %459 = vst [vmem:[%s431 + $0x68] sm:$0xff] %v458
                  %v460 = vld [vmem:[%s430 + $0xd0] sm:$0xff]
                  %461 = vst [vmem:[%s431 + $0x70] sm:$0xff] %v460
                  %v462 = vld [vmem:[%s430 + $0xd8] sm:$0xff]
                  %463 = vst [vmem:[%s431 + $0x78] sm:$0xff] %v462
                  %v464 = vld [vmem:[%s430 + $0x100] sm:$0xff]
                  %465 = vst [vmem:[%s431 + $0x80] sm:$0xff] %v464
                  %v466 = vld [vmem:[%s430 + $0x108] sm:$0xff]
                  %467 = vst [vmem:[%s431 + $0x88] sm:$0xff] %v466
                  %v468 = vld [vmem:[%s430 + $0x110] sm:$0xff]
                  %469 = vst [vmem:[%s431 + $0x90] sm:$0xff] %v468
                  %v470 = vld [vmem:[%s430 + $0x118] sm:$0xff]
                  %471 = vst [vmem:[%s431 + $0x98] sm:$0xff] %v470
                  %v472 = vld [vmem:[%s430 + $0x140] sm:$0xff]
                  %473 = vst [vmem:[%s431 + $0xa0] sm:$0xff] %v472
                  %v474 = vld [vmem:[%s430 + $0x148] sm:$0xff]
                  %475 = vst [vmem:[%s431 + $0xa8] sm:$0xff] %v474
                  %v476 = vld [vmem:[%s430 + $0x150] sm:$0xff]
                  %477 = vst [vmem:[%s431 + $0xb0] sm:$0xff] %v476
                  %v478 = vld [vmem:[%s430 + $0x158] sm:$0xff]
                  %479 = vst [vmem:[%s431 + $0xb8] sm:$0xff] %v478
                  %v480 = vld [vmem:[%s430 + $0x180] sm:$0xff]
                  %481 = vst [vmem:[%s431 + $0xc0] sm:$0xff] %v480
                  %v482 = vld [vmem:[%s430 + $0x188] sm:$0xff]
                  %483 = vst [vmem:[%s431 + $0xc8] sm:$0xff] %v482
                  %v484 = vld [vmem:[%s430 + $0x190] sm:$0xff]
                  %485 = vst [vmem:[%s431 + $0xd0] sm:$0xff] %v484
                  %v486 = vld [vmem:[%s430 + $0x198] sm:$0xff]
                  %487 = vst [vmem:[%s431 + $0xd8] sm:$0xff] %v486
                  %v488 = vld [vmem:[%s430 + $0x1c0] sm:$0xff]
                  %489 = vst [vmem:[%s431 + $0xe0] sm:$0xff] %v488
                  %v490 = vld [vmem:[%s430 + $0x1c8] sm:$0xff]
                  %491 = vst [vmem:[%s431 + $0xe8] sm:$0xff] %v490
                  %v492 = vld [vmem:[%s430 + $0x1d0] sm:$0xff]
                  %493 = vst [vmem:[%s431 + $0xf0] sm:$0xff] %v492
                  %v494 = vld [vmem:[%s430 + $0x1d8] sm:$0xff]
                  %495 = vst [vmem:[%s431 + $0xf8] sm:$0xff] %v494
                $region72: #{scorer_forward.1} parent=66 // loop_footer
                  %s429 = sadd.s32 1, %s425
                $region73: #{scorer_forward.1} parent=66 // loop_footer_branch
                  %424 = sbr.rel target = $region69
                $region74: #{scorer_forward.1} parent=66 // loop_exit
                  _
              $region67: #{scorer_forward.1} parent=51 // pred_fallthru
                _
              // Predicated region
              $region75: #{scorer_forward.1} parent=51 // pred_check
                _
              $region76: #{scorer_forward.1} parent=51 // pred_check_branch
                %497 = sbr.rel target = $region78
              $region77: #{scorer_forward.1} parent=51 // pred_region
                _
              $region78: #{scorer_forward.1} parent=51 // pred_fallthru
                _
            $region52: #{scorer_forward.1} parent=47 // pred_fallthru
              _
            // Predicated region
            $region53: #{scorer_forward.1} parent=47 // pred_check
              _
            $region54: #{scorer_forward.1} parent=47 // pred_check_branch
              %348 = sbr.rel target = $region56
            $region55: #{scorer_forward.1} parent=47 // pred_region
              loop: start=0, step=1, limit=1
              $region57: #{scorer_forward.1} parent=55 // loop_pre_header
                _
              $region58: #{scorer_forward.1} parent=55 // loop_header
                %s351 = sphi 0, %s355
                %p352 = scmp.ge.s32.totalorder %s351, 1
                %s356 = sphi %s342, %s342
                %s357 = sphi %s335, %s335
              $region59: #{scorer_forward.1} parent=55 // loop_header_branch
                %354 = sbr.rel (%p352) target = $region63
              $region60: #{scorer_forward.1} parent=55 // loop_body
                %v358 = vld [vmem:[%s356] sm:$0xff]
                %359 = vst [vmem:[%s357] sm:$0xff] %v358
                %v360 = vld [vmem:[%s356 + $0x8] sm:$0xff]
                %361 = vst [vmem:[%s357 + $0x8] sm:$0xff] %v360
                %v362 = vld [vmem:[%s356 + $0x10] sm:$0xff]
                %363 = vst [vmem:[%s357 + $0x10] sm:$0xff] %v362
                %v364 = vld [vmem:[%s356 + $0x18] sm:$0xff]
                %365 = vst [vmem:[%s357 + $0x18] sm:$0xff] %v364
                %v366 = vld [vmem:[%s356 + $0x40] sm:$0xff]
                %367 = vst [vmem:[%s357 + $0x20] sm:$0xff] %v366
                %v368 = vld [vmem:[%s356 + $0x48] sm:$0xff]
                %369 = vst [vmem:[%s357 + $0x28] sm:$0xff] %v368
                %v370 = vld [vmem:[%s356 + $0x50] sm:$0xff]
                %371 = vst [vmem:[%s357 + $0x30] sm:$0xff] %v370
                %v372 = vld [vmem:[%s356 + $0x58] sm:$0xff]
                %373 = vst [vmem:[%s357 + $0x38] sm:$0xff] %v372
                %v374 = vld [vmem:[%s356 + $0x80] sm:$0xff]
                %375 = vst [vmem:[%s357 + $0x40] sm:$0xff] %v374
                %v376 = vld [vmem:[%s356 + $0x88] sm:$0xff]
                %377 = vst [vmem:[%s357 + $0x48] sm:$0xff] %v376
                %v378 = vld [vmem:[%s356 + $0x90] sm:$0xff]
                %379 = vst [vmem:[%s357 + $0x50] sm:$0xff] %v378
                %v380 = vld [vmem:[%s356 + $0x98] sm:$0xff]
                %381 = vst [vmem:[%s357 + $0x58] sm:$0xff] %v380
                %v382 = vld [vmem:[%s356 + $0xc0] sm:$0xff]
                %383 = vst [vmem:[%s357 + $0x60] sm:$0xff] %v382
                %v384 = vld [vmem:[%s356 + $0xc8] sm:$0xff]
                %385 = vst [vmem:[%s357 + $0x68] sm:$0xff] %v384
                %v386 = vld [vmem:[%s356 + $0xd0] sm:$0xff]
                %387 = vst [vmem:[%s357 + $0x70] sm:$0xff] %v386
                %v388 = vld [vmem:[%s356 + $0xd8] sm:$0xff]
                %389 = vst [vmem:[%s357 + $0x78] sm:$0xff] %v388
                %v390 = vld [vmem:[%s356 + $0x100] sm:$0xff]
                %391 = vst [vmem:[%s357 + $0x80] sm:$0xff] %v390
                %v392 = vld [vmem:[%s356 + $0x108] sm:$0xff]
                %393 = vst [vmem:[%s357 + $0x88] sm:$0xff] %v392
                %v394 = vld [vmem:[%s356 + $0x110] sm:$0xff]
                %395 = vst [vmem:[%s357 + $0x90] sm:$0xff] %v394
                %v396 = vld [vmem:[%s356 + $0x118] sm:$0xff]
                %397 = vst [vmem:[%s357 + $0x98] sm:$0xff] %v396
                %v398 = vld [vmem:[%s356 + $0x140] sm:$0xff]
                %399 = vst [vmem:[%s357 + $0xa0] sm:$0xff] %v398
                %v400 = vld [vmem:[%s356 + $0x148] sm:$0xff]
                %401 = vst [vmem:[%s357 + $0xa8] sm:$0xff] %v400
                %v402 = vld [vmem:[%s356 + $0x150] sm:$0xff]
                %403 = vst [vmem:[%s357 + $0xb0] sm:$0xff] %v402
                %v404 = vld [vmem:[%s356 + $0x158] sm:$0xff]
                %405 = vst [vmem:[%s357 + $0xb8] sm:$0xff] %v404
                %v406 = vld [vmem:[%s356 + $0x180] sm:$0xff]
                %407 = vst [vmem:[%s357 + $0xc0] sm:$0xff] %v406
                %v408 = vld [vmem:[%s356 + $0x188] sm:$0xff]
                %409 = vst [vmem:[%s357 + $0xc8] sm:$0xff] %v408
                %v410 = vld [vmem:[%s356 + $0x190] sm:$0xff]
                %411 = vst [vmem:[%s357 + $0xd0] sm:$0xff] %v410
                %v412 = vld [vmem:[%s356 + $0x198] sm:$0xff]
                %413 = vst [vmem:[%s357 + $0xd8] sm:$0xff] %v412
                %v414 = vld [vmem:[%s356 + $0x1c0] sm:$0xff]
                %415 = vst [vmem:[%s357 + $0xe0] sm:$0xff] %v414
                %v416 = vld [vmem:[%s356 + $0x1c8] sm:$0xff]
                %417 = vst [vmem:[%s357 + $0xe8] sm:$0xff] %v416
                %v418 = vld [vmem:[%s356 + $0x1d0] sm:$0xff]
                %419 = vst [vmem:[%s357 + $0xf0] sm:$0xff] %v418
                %v420 = vld [vmem:[%s356 + $0x1d8] sm:$0xff]
                %421 = vst [vmem:[%s357 + $0xf8] sm:$0xff] %v420
              $region61: #{scorer_forward.1} parent=55 // loop_footer
                %s355 = sadd.s32 1, %s351
              $region62: #{scorer_forward.1} parent=55 // loop_footer_branch
                %350 = sbr.rel target = $region58
              $region63: #{scorer_forward.1} parent=55 // loop_exit
                _
            $region56: #{scorer_forward.1} parent=47 // pred_fallthru
              _
          $region48: #{scorer_forward.1} parent=43 // pred_fallthru
            _
          %498 = vnop
        $region44: #{scorer_forward.1} parent=39 // pred_fallthru
          _
        // Predicated region
        $region79: #{scorer_forward.1} parent=39 // pred_check
          %p499 = pneg %p82
        $region80: #{scorer_forward.1} parent=39 // pred_check_branch
          %501 = sbr.rel (%p499) target = $region82
        $region81: #{scorer_forward.1} parent=39 // pred_region
          #allocation7 [shape = 'u32[6]{0}', space=smem, size = 0x18, scoped, tag = 'DMA stride descriptor']
          %s502 = sand.u32 %s72, 1
          %s503 = scalar_lea.sflag [#allocation5], %s502
          %s504 = sand.u32 %s72, 1
          %s505 = smul.addr %s504, 256
          %s506 = scalar_lea.vmem [#allocation4], %s505
          %s507 = smul.u32 8, %s27
          %s508 = smul.u32 4, %s28
          %s510 = ssub.s32 4096, 4096
          %511 = vsyncadd %s503, %s510
          %s512 = smul.addr %s508, 2
          %s513 = smul.addr %s507, 16
          %s514 = sadd.s32 %s512, %s513
          %s515 = smul.addr %s514, 64
          %s516 = scalar_lea.hbm %s1, %s515
          %s518 = sshll.u32 1, 14
          %s519 = sxor.u32 4294967295, %s518
          %s521 = sld [smem:[#allocation0]]
          %s522 = sadd.s32 2, %s521
          %s524 = sshll.u32 7, 26
          %s525 = sxor.u32 4294967295, %s524
          %s526 = sand.u32 0, %s525
          %s527 = sshll.u32 %s522, 26
          %s528 = sor.u32 %s526, %s527
          %s529 = sshll.u32 %s506, 4
          %s530 = int_to_ptr.vmem [resolvable:$true] %s529
          %536 = sst [smem:[#allocation7]] 1024
          %s537 = scalar_lea.smem [#allocation7], 1
          %538 = sst [smem:[%s537]] 512
          %s539 = scalar_lea.smem [#allocation7], 2
          %540 = sst [smem:[%s539]] 4
          %s541 = scalar_lea.smem [#allocation7], 3
          %542 = sst [smem:[%s541]] 128
          %s543 = scalar_lea.smem [#allocation7], 4
          %544 = sst [smem:[%s543]] 128
          %s545 = scalar_lea.smem [#allocation7], 5
          %546 = sst [smem:[%s545]] 8
          %548 = dma.general %s516, 4096, %s530, %s503, [#allocation6], [#allocation7], %s528, 0
        $region82: #{scorer_forward.1} parent=39 // pred_fallthru
          _
        // Predicated region
        $region83: #{scorer_forward.1} parent=39 // pred_check
          %p549 = pneg %p108
        $region84: #{scorer_forward.1} parent=39 // pred_check_branch
          %551 = sbr.rel (%p549) target = $region86
        $region85: #{scorer_forward.1} parent=39 // pred_region
          %p552 = scmp.lt.s32.totalorder %s27, 1
          %s553 = scalar_select %p552, %s27, 1
          %s554 = smul.addr %s553, 8
          %s555 = scalar_lea.vmem %s2, %s554
        $region86: #{scorer_forward.1} parent=39 // pred_fallthru
          _
      $region40: #{scorer_forward.1} parent=5 // pred_fallthru
        _
      %p556 = scmp.le.s32.totalorder 1, %s20
      %p557 = scmp.lt.s32.totalorder %s20, 5
      %p558 = pnand %p556, %p557
      %p559 = pneg %p558
      // Predicated region
      $region87: #{scorer_forward.1} parent=5 // pred_check
        _
      $region88: #{scorer_forward.1} parent=5 // pred_check_branch
        %561 = sbr.rel (%p558) target = $region90
      $region89: #{scorer_forward.1} parent=5 // pred_region
        %s562 = ssub.s32 %s20, 1
        %s563 = sand.u32 %s47, 1
        %s564 = sand.u32 %s47, 1
        %s565 = smul.addr %s564, 256
        %s566 = scalar_lea.vmem [#allocation3], %s565
        // Predicated region
        $region91: #{scorer_forward.1} parent=89 // pred_check
          %p567 = pneg %p60
        $region92: #{scorer_forward.1} parent=89 // pred_check_branch
          %569 = sbr.rel (%p567) target = $region94
        $region93: #{scorer_forward.1} parent=89 // pred_region
          _
        $region94: #{scorer_forward.1} parent=89 // pred_fallthru
          _
        %s570 = sand.u32 %s75, 1
        %s571 = scalar_lea.sflag [#allocation5], %s570
        %s572 = sand.u32 %s75, 1
        %s573 = smul.addr %s572, 256
        %s574 = scalar_lea.vmem [#allocation4], %s573
        // Predicated region
        $region95: #{scorer_forward.1} parent=89 // pred_check
          %p575 = pneg %p88
        $region96: #{scorer_forward.1} parent=89 // pred_check_branch
          %577 = sbr.rel (%p575) target = $region98
        $region97: #{scorer_forward.1} parent=89 // pred_region
          %578 = dma.done %s571, 4096
        $region98: #{scorer_forward.1} parent=89 // pred_fallthru
          _
        %s579 = sand.u32 %s47, 1
        %s580 = sand.u32 %s47, 1
        %s581 = smul.addr %s580, 256
        %s582 = scalar_lea.vmem [#allocation3], %s581
        %p583 = pneg %p60
        %p584 = pneg %p57
        %s585 = sand.u32 %s75, 1
        %s586 = scalar_lea.sflag [#allocation5], %s585
        %s587 = sand.u32 %s75, 1
        %s588 = smul.addr %s587, 256
        %s589 = scalar_lea.vmem [#allocation4], %s588
        %p590 = pneg %p88
        %p591 = pneg %p85
        %p592 = scmp.lt.s32.totalorder %s29, 1
        %s593 = scalar_select %p592, %s29, 1
        %s594 = smul.addr %s593, 8
        %s595 = scalar_lea.vmem %s2, %s594
        %p596 = pneg %p114
        %p597 = pneg %p111
        %p598 = pneg %p135
        %p599 = pneg %p132
        %p600 = pneg %p156
        %p601 = pneg %p153
        %p602 = pneg %p177
        %p603 = pneg %p174
        %p604 = pneg %p198
        %p605 = pneg %p195
        %p606 = pneg %p219
        %p607 = pneg %p216
        %p608 = pneg %p240
        %p609 = pneg %p237
        %p610 = pneg %p266
        %p611 = pneg %p263
        %p612 = scmp.lt.s32.totalorder %s29, 1
        %s613 = scalar_select %p612, %s29, 1
        %s614 = smul.addr %s613, 8
        %s615 = scalar_lea.vmem %s9, %s614
        %p616 = pneg %p292
        %p617 = pneg %p289
        %p618 = scmp.lt.s32.totalorder %s29, 1
        %s619 = scalar_select %p618, %s29, 1
        %s620 = smul.addr %s619, 8
        %s621 = scalar_lea.vmem %s10, %s620
        %s622 = smul.u32 8, %s29
        %s623 = smul.u32 4, %s30
        %s624 = smul.u32 8, %s29
        %s625 = smul.u32 4, %s30
        %p626 = scmp.lt.s32.totalorder %s29, 1
        %s627 = scalar_select %p626, %s29, 1
        %s628 = smul.addr %s627, 8
        %s629 = scalar_lea.vmem %s2, %s628
        %p630 = scmp.lt.s32.totalorder %s29, 1
        %s631 = scalar_select %p630, %s29, 1
        %s632 = smul.addr %s631, 8
        %s633 = scalar_lea.vmem %s9, %s632
        %p634 = scmp.lt.s32.totalorder %s29, 1
        %s635 = scalar_select %p634, %s29, 1
        %s636 = smul.addr %s635, 8
        %s637 = scalar_lea.vmem %s10, %s636
        %p638 = scmp.eq.s32.totalorder %s30, 0
        // Predicated region
        $region99: #{scorer_forward.1} parent=89 // pred_check
          %p639 = pneg %p638
        $region100: #{scorer_forward.1} parent=89 // pred_check_branch
          %641 = sbr.rel (%p639) target = $region102
        $region101: #{scorer_forward.1} parent=89 // pred_region
          %642 = vst [vmem:[#allocation2] sm:$0xff] 0.0
          %643 = vst [vmem:[#allocation2 + $0x8] sm:$0xff] 0.0
        $region102: #{scorer_forward.1} parent=89 // pred_fallthru
          _
        %v644 = vld [vmem:[%s566] sm:$0xff]
        %v645 = vld [vmem:[%s566 + $0x8] sm:$0xff]
        %v646 = vld [vmem:[%s566 + $0x10] sm:$0xff]
        %v647 = vld [vmem:[%s566 + $0x18] sm:$0xff]
        %v648 = vld [vmem:[%s566 + $0x20] sm:$0xff]
        %v649 = vld [vmem:[%s566 + $0x28] sm:$0xff]
        %v650 = vld [vmem:[%s566 + $0x30] sm:$0xff]
        %v651 = vld [vmem:[%s566 + $0x38] sm:$0xff]
        %v652 = vld [vmem:[%s566 + $0x40] sm:$0xff]
        %v653 = vld [vmem:[%s566 + $0x48] sm:$0xff]
        %v654 = vld [vmem:[%s566 + $0x50] sm:$0xff]
        %v655 = vld [vmem:[%s566 + $0x58] sm:$0xff]
        %v656 = vld [vmem:[%s566 + $0x60] sm:$0xff]
        %v657 = vld [vmem:[%s566 + $0x68] sm:$0xff]
        %v658 = vld [vmem:[%s566 + $0x70] sm:$0xff]
        %v659 = vld [vmem:[%s566 + $0x78] sm:$0xff]
        %v660 = vld [vmem:[%s566 + $0x80] sm:$0xff]
        %v661 = vld [vmem:[%s566 + $0x88] sm:$0xff]
        %v662 = vld [vmem:[%s566 + $0x90] sm:$0xff]
        %v663 = vld [vmem:[%s566 + $0x98] sm:$0xff]
        %v664 = vld [vmem:[%s566 + $0xa0] sm:$0xff]
        %v665 = vld [vmem:[%s566 + $0xa8] sm:$0xff]
        %v666 = vld [vmem:[%s566 + $0xb0] sm:$0xff]
        %v667 = vld [vmem:[%s566 + $0xb8] sm:$0xff]
        %v668 = vld [vmem:[%s566 + $0xc0] sm:$0xff]
        %v669 = vld [vmem:[%s566 + $0xc8] sm:$0xff]
        %v670 = vld [vmem:[%s566 + $0xd0] sm:$0xff]
        %v671 = vld [vmem:[%s566 + $0xd8] sm:$0xff]
        %v672 = vld [vmem:[%s566 + $0xe0] sm:$0xff]
        %v673 = vld [vmem:[%s566 + $0xe8] sm:$0xff]
        %v674 = vld [vmem:[%s566 + $0xf0] sm:$0xff]
        %v675 = vld [vmem:[%s566 + $0xf8] sm:$0xff]
        %v676 = vunpack.c.l.bf16 %v644
        %v677 = vunpack.c.h.bf16 %v644
        %v678 = vunpack.c.l.bf16 %v645
        %v679 = vunpack.c.h.bf16 %v645
        %v680 = vunpack.c.l.bf16 %v646
        %v681 = vunpack.c.h.bf16 %v646
        %v682 = vunpack.c.l.bf16 %v647
        %v683 = vunpack.c.h.bf16 %v647
        %v684 = vunpack.c.l.bf16 %v648
        %v685 = vunpack.c.h.bf16 %v648
        %v686 = vunpack.c.l.bf16 %v649
        %v687 = vunpack.c.h.bf16 %v649
        %v688 = vunpack.c.l.bf16 %v650
        %v689 = vunpack.c.h.bf16 %v650
        %v690 = vunpack.c.l.bf16 %v651
        %v691 = vunpack.c.h.bf16 %v651
        %v692 = vunpack.c.l.bf16 %v652
        %v693 = vunpack.c.h.bf16 %v652
        %v694 = vunpack.c.l.bf16 %v653
        %v695 = vunpack.c.h.bf16 %v653
        %v696 = vunpack.c.l.bf16 %v654
        %v697 = vunpack.c.h.bf16 %v654
        %v698 = vunpack.c.l.bf16 %v655
        %v699 = vunpack.c.h.bf16 %v655
        %v700 = vunpack.c.l.bf16 %v656
        %v701 = vunpack.c.h.bf16 %v656
        %v702 = vunpack.c.l.bf16 %v657
        %v703 = vunpack.c.h.bf16 %v657
        %v704 = vunpack.c.l.bf16 %v658
        %v705 = vunpack.c.h.bf16 %v658
        %v706 = vunpack.c.l.bf16 %v659
        %v707 = vunpack.c.h.bf16 %v659
        %v708 = vunpack.c.l.bf16 %v660
        %v709 = vunpack.c.h.bf16 %v660
        %v710 = vunpack.c.l.bf16 %v661
        %v711 = vunpack.c.h.bf16 %v661
        %v712 = vunpack.c.l.bf16 %v662
        %v713 = vunpack.c.h.bf16 %v662
        %v714 = vunpack.c.l.bf16 %v663
        %v715 = vunpack.c.h.bf16 %v663
        %v716 = vunpack.c.l.bf16 %v664
        %v717 = vunpack.c.h.bf16 %v664
        %v718 = vunpack.c.l.bf16 %v665
        %v719 = vunpack.c.h.bf16 %v665
        %v720 = vunpack.c.l.bf16 %v666
        %v721 = vunpack.c.h.bf16 %v666
        %v722 = vunpack.c.l.bf16 %v667
        %v723 = vunpack.c.h.bf16 %v667
        %v724 = vunpack.c.l.bf16 %v668
        %v725 = vunpack.c.h.bf16 %v668
        %v726 = vunpack.c.l.bf16 %v669
        %v727 = vunpack.c.h.bf16 %v669
        %v728 = vunpack.c.l.bf16 %v670
        %v729 = vunpack.c.h.bf16 %v670
        %v730 = vunpack.c.l.bf16 %v671
        %v731 = vunpack.c.h.bf16 %v671
        %v732 = vunpack.c.l.bf16 %v672
        %v733 = vunpack.c.h.bf16 %v672
        %v734 = vunpack.c.l.bf16 %v673
        %v735 = vunpack.c.h.bf16 %v673
        %v736 = vunpack.c.l.bf16 %v674
        %v737 = vunpack.c.h.bf16 %v674
        %v738 = vunpack.c.l.bf16 %v675
        %v739 = vunpack.c.h.bf16 %v675
        %v740 = vld [vmem:[%s574] sm:$0xff]
        %v741 = vld [vmem:[%s574 + $0x8] sm:$0xff]
        %v742 = vld [vmem:[%s574 + $0x10] sm:$0xff]
        %v743 = vld [vmem:[%s574 + $0x18] sm:$0xff]
        %v744 = vld [vmem:[%s574 + $0x20] sm:$0xff]
        %v745 = vld [vmem:[%s574 + $0x28] sm:$0xff]
        %v746 = vld [vmem:[%s574 + $0x30] sm:$0xff]
        %v747 = vld [vmem:[%s574 + $0x38] sm:$0xff]
        %v748 = vld [vmem:[%s574 + $0x40] sm:$0xff]
        %v749 = vld [vmem:[%s574 + $0x48] sm:$0xff]
        %v750 = vld [vmem:[%s574 + $0x50] sm:$0xff]
        %v751 = vld [vmem:[%s574 + $0x58] sm:$0xff]
        %v752 = vld [vmem:[%s574 + $0x60] sm:$0xff]
        %v753 = vld [vmem:[%s574 + $0x68] sm:$0xff]
        %v754 = vld [vmem:[%s574 + $0x70] sm:$0xff]
        %v755 = vld [vmem:[%s574 + $0x78] sm:$0xff]
        %v756 = vld [vmem:[%s574 + $0x80] sm:$0xff]
        %v757 = vld [vmem:[%s574 + $0x88] sm:$0xff]
        %v758 = vld [vmem:[%s574 + $0x90] sm:$0xff]
        %v759 = vld [vmem:[%s574 + $0x98] sm:$0xff]
        %v760 = vld [vmem:[%s574 + $0xa0] sm:$0xff]
        %v761 = vld [vmem:[%s574 + $0xa8] sm:$0xff]
        %v762 = vld [vmem:[%s574 + $0xb0] sm:$0xff]
        %v763 = vld [vmem:[%s574 + $0xb8] sm:$0xff]
        %v764 = vld [vmem:[%s574 + $0xc0] sm:$0xff]
        %v765 = vld [vmem:[%s574 + $0xc8] sm:$0xff]
        %v766 = vld [vmem:[%s574 + $0xd0] sm:$0xff]
        %v767 = vld [vmem:[%s574 + $0xd8] sm:$0xff]
        %v768 = vld [vmem:[%s574 + $0xe0] sm:$0xff]
        %v769 = vld [vmem:[%s574 + $0xe8] sm:$0xff]
        %v770 = vld [vmem:[%s574 + $0xf0] sm:$0xff]
        %v771 = vld [vmem:[%s574 + $0xf8] sm:$0xff]
        %v772 = vunpack.c.l.bf16 %v740
        %v773 = vunpack.c.h.bf16 %v740
        %v774 = vunpack.c.l.bf16 %v741
        %v775 = vunpack.c.h.bf16 %v741
        %v776 = vunpack.c.l.bf16 %v742
        %v777 = vunpack.c.h.bf16 %v742
        %v778 = vunpack.c.l.bf16 %v743
        %v779 = vunpack.c.h.bf16 %v743
        %v780 = vunpack.c.l.bf16 %v744
        %v781 = vunpack.c.h.bf16 %v744
        %v782 = vunpack.c.l.bf16 %v745
        %v783 = vunpack.c.h.bf16 %v745
        %v784 = vunpack.c.l.bf16 %v746
        %v785 = vunpack.c.h.bf16 %v746
        %v786 = vunpack.c.l.bf16 %v747
        %v787 = vunpack.c.h.bf16 %v747
        %v788 = vunpack.c.l.bf16 %v748
        %v789 = vunpack.c.h.bf16 %v748
        %v790 = vunpack.c.l.bf16 %v749
        %v791 = vunpack.c.h.bf16 %v749
        %v792 = vunpack.c.l.bf16 %v750
        %v793 = vunpack.c.h.bf16 %v750
        %v794 = vunpack.c.l.bf16 %v751
        %v795 = vunpack.c.h.bf16 %v751
        %v796 = vunpack.c.l.bf16 %v752
        %v797 = vunpack.c.h.bf16 %v752
        %v798 = vunpack.c.l.bf16 %v753
        %v799 = vunpack.c.h.bf16 %v753
        %v800 = vunpack.c.l.bf16 %v754
        %v801 = vunpack.c.h.bf16 %v754
        %v802 = vunpack.c.l.bf16 %v755
        %v803 = vunpack.c.h.bf16 %v755
        %v804 = vunpack.c.l.bf16 %v756
        %v805 = vunpack.c.h.bf16 %v756
        %v806 = vunpack.c.l.bf16 %v757
        %v807 = vunpack.c.h.bf16 %v757
        %v808 = vunpack.c.l.bf16 %v758
        %v809 = vunpack.c.h.bf16 %v758
        %v810 = vunpack.c.l.bf16 %v759
        %v811 = vunpack.c.h.bf16 %v759
        %v812 = vunpack.c.l.bf16 %v760
        %v813 = vunpack.c.h.bf16 %v760
        %v814 = vunpack.c.l.bf16 %v761
        %v815 = vunpack.c.h.bf16 %v761
        %v816 = vunpack.c.l.bf16 %v762
        %v817 = vunpack.c.h.bf16 %v762
        %v818 = vunpack.c.l.bf16 %v763
        %v819 = vunpack.c.h.bf16 %v763
        %v820 = vunpack.c.l.bf16 %v764
        %v821 = vunpack.c.h.bf16 %v764
        %v822 = vunpack.c.l.bf16 %v765
        %v823 = vunpack.c.h.bf16 %v765
        %v824 = vunpack.c.l.bf16 %v766
        %v825 = vunpack.c.h.bf16 %v766
        %v826 = vunpack.c.l.bf16 %v767
        %v827 = vunpack.c.h.bf16 %v767
        %v828 = vunpack.c.l.bf16 %v768
        %v829 = vunpack.c.h.bf16 %v768
        %v830 = vunpack.c.l.bf16 %v769
        %v831 = vunpack.c.h.bf16 %v769
        %v832 = vunpack.c.l.bf16 %v770
        %v833 = vunpack.c.h.bf16 %v770
        %v834 = vunpack.c.l.bf16 %v771
        %v835 = vunpack.c.h.bf16 %v771
        %v836 = vsub.f32 %v676, %v772
        %v837 = vsub.f32 %v677, %v773
        %v838 = vsub.f32 %v678, %v774
        %v839 = vsub.f32 %v679, %v775
        %v840 = vsub.f32 %v680, %v776
        %v841 = vsub.f32 %v681, %v777
        %v842 = vsub.f32 %v682, %v778
        %v843 = vsub.f32 %v683, %v779
        %v844 = vsub.f32 %v684, %v780
        %v845 = vsub.f32 %v685, %v781
        %v846 = vsub.f32 %v686, %v782
        %v847 = vsub.f32 %v687, %v783
        %v848 = vsub.f32 %v688, %v784
        %v849 = vsub.f32 %v689, %v785
        %v850 = vsub.f32 %v690, %v786
        %v851 = vsub.f32 %v691, %v787
        %v852 = vsub.f32 %v692, %v788
        %v853 = vsub.f32 %v693, %v789
        %v854 = vsub.f32 %v694, %v790
        %v855 = vsub.f32 %v695, %v791
        %v856 = vsub.f32 %v696, %v792
        %v857 = vsub.f32 %v697, %v793
        %v858 = vsub.f32 %v698, %v794
        %v859 = vsub.f32 %v699, %v795
        %v860 = vsub.f32 %v700, %v796
        %v861 = vsub.f32 %v701, %v797
        %v862 = vsub.f32 %v702, %v798
        %v863 = vsub.f32 %v703, %v799
        %v864 = vsub.f32 %v704, %v800
        %v865 = vsub.f32 %v705, %v801
        %v866 = vsub.f32 %v706, %v802
        %v867 = vsub.f32 %v707, %v803
        %v868 = vsub.f32 %v708, %v804
        %v869 = vsub.f32 %v709, %v805
        %v870 = vsub.f32 %v710, %v806
        %v871 = vsub.f32 %v711, %v807
        %v872 = vsub.f32 %v712, %v808
        %v873 = vsub.f32 %v713, %v809
        %v874 = vsub.f32 %v714, %v810
        %v875 = vsub.f32 %v715, %v811
        %v876 = vsub.f32 %v716, %v812
        %v877 = vsub.f32 %v717, %v813
        %v878 = vsub.f32 %v718, %v814
        %v879 = vsub.f32 %v719, %v815
        %v880 = vsub.f32 %v720, %v816
        %v881 = vsub.f32 %v721, %v817
        %v882 = vsub.f32 %v722, %v818
        %v883 = vsub.f32 %v723, %v819
        %v884 = vsub.f32 %v724, %v820
        %v885 = vsub.f32 %v725, %v821
        %v886 = vsub.f32 %v726, %v822
        %v887 = vsub.f32 %v727, %v823
        %v888 = vsub.f32 %v728, %v824
        %v889 = vsub.f32 %v729, %v825
        %v890 = vsub.f32 %v730, %v826
        %v891 = vsub.f32 %v731, %v827
        %v892 = vsub.f32 %v732, %v828
        %v893 = vsub.f32 %v733, %v829
        %v894 = vsub.f32 %v734, %v830
        %v895 = vsub.f32 %v735, %v831
        %v896 = vsub.f32 %v736, %v832
        %v897 = vsub.f32 %v737, %v833
        %v898 = vsub.f32 %v738, %v834
        %v899 = vsub.f32 %v739, %v835
        %v900 = vld [vmem:[#allocation2] sm:$0xff]
        %v901 = vld [vmem:[#allocation2 + $0x8] sm:$0xff]
        %v902 = vadd.f32 %v836, %v838
        %v903 = vadd.f32 %v902, %v840
        %v904 = vadd.f32 %v903, %v842
        %v905 = vrot.slane %v904, 4
        %v906 = vadd.f32 %v904, %v905
        %v907 = vrot.slane %v906, 2
        %v908 = vadd.f32 %v906, %v907
        %v909 = vrot.slane %v908, 1
        %v910 = vadd.f32 %v908, %v909
        %v911 = vadd.f32 %v837, %v839
        %v912 = vadd.f32 %v911, %v841
        %v913 = vadd.f32 %v912, %v843
        %v914 = vrot.slane %v913, 4
        %v915 = vadd.f32 %v913, %v914
        %v916 = vrot.slane %v915, 2
        %v917 = vadd.f32 %v915, %v916
        %v918 = vrot.slane %v917, 1
        %v919 = vadd.f32 %v917, %v918
        %v920 = vadd.f32 %v844, %v846
        %v921 = vadd.f32 %v920, %v848
        %v922 = vadd.f32 %v921, %v850
        %v923 = vrot.slane %v922, 4
        %v924 = vadd.f32 %v922, %v923
        %v925 = vrot.slane %v924, 2
        %v926 = vadd.f32 %v924, %v925
        %v927 = vrot.slane %v926, 1
        %v928 = vadd.f32 %v926, %v927
        %v929 = vadd.f32 %v845, %v847
        %v930 = vadd.f32 %v929, %v849
        %v931 = vadd.f32 %v930, %v851
        %v932 = vrot.slane %v931, 4
        %v933 = vadd.f32 %v931, %v932
        %v934 = vrot.slane %v933, 2
        %v935 = vadd.f32 %v933, %v934
        %v936 = vrot.slane %v935, 1
        %v937 = vadd.f32 %v935, %v936
        %v938 = vadd.f32 %v852, %v854
        %v939 = vadd.f32 %v938, %v856
        %v940 = vadd.f32 %v939, %v858
        %v941 = vrot.slane %v940, 4
        %v942 = vadd.f32 %v940, %v941
        %v943 = vrot.slane %v942, 2
        %v944 = vadd.f32 %v942, %v943
        %v945 = vrot.slane %v944, 1
        %v946 = vadd.f32 %v944, %v945
        %v947 = vadd.f32 %v853, %v855
        %v948 = vadd.f32 %v947, %v857
        %v949 = vadd.f32 %v948, %v859
        %v950 = vrot.slane %v949, 4
        %v951 = vadd.f32 %v949, %v950
        %v952 = vrot.slane %v951, 2
        %v953 = vadd.f32 %v951, %v952
        %v954 = vrot.slane %v953, 1
        %v955 = vadd.f32 %v953, %v954
        %v956 = vadd.f32 %v860, %v862
        %v957 = vadd.f32 %v956, %v864
        %v958 = vadd.f32 %v957, %v866
        %v959 = vrot.slane %v958, 4
        %v960 = vadd.f32 %v958, %v959
        %v961 = vrot.slane %v960, 2
        %v962 = vadd.f32 %v960, %v961
        %v963 = vrot.slane %v962, 1
        %v964 = vadd.f32 %v962, %v963
        %v965 = vadd.f32 %v861, %v863
        %v966 = vadd.f32 %v965, %v865
        %v967 = vadd.f32 %v966, %v867
        %v968 = vrot.slane %v967, 4
        %v969 = vadd.f32 %v967, %v968
        %v970 = vrot.slane %v969, 2
        %v971 = vadd.f32 %v969, %v970
        %v972 = vrot.slane %v971, 1
        %v973 = vadd.f32 %v971, %v972
        %v974 = vadd.f32 %v868, %v870
        %v975 = vadd.f32 %v974, %v872
        %v976 = vadd.f32 %v975, %v874
        %v977 = vrot.slane %v976, 4
        %v978 = vadd.f32 %v976, %v977
        %v979 = vrot.slane %v978, 2
        %v980 = vadd.f32 %v978, %v979
        %v981 = vrot.slane %v980, 1
        %v982 = vadd.f32 %v980, %v981
        %v983 = vadd.f32 %v869, %v871
        %v984 = vadd.f32 %v983, %v873
        %v985 = vadd.f32 %v984, %v875
        %v986 = vrot.slane %v985, 4
        %v987 = vadd.f32 %v985, %v986
        %v988 = vrot.slane %v987, 2
        %v989 = vadd.f32 %v987, %v988
        %v990 = vrot.slane %v989, 1
        %v991 = vadd.f32 %v989, %v990
        %v992 = vadd.f32 %v876, %v878
        %v993 = vadd.f32 %v992, %v880
        %v994 = vadd.f32 %v993, %v882
        %v995 = vrot.slane %v994, 4
        %v996 = vadd.f32 %v994, %v995
        %v997 = vrot.slane %v996, 2
        %v998 = vadd.f32 %v996, %v997
        %v999 = vrot.slane %v998, 1
        %v1000 = vadd.f32 %v998, %v999
        %v1001 = vadd.f32 %v877, %v879
        %v1002 = vadd.f32 %v1001, %v881
        %v1003 = vadd.f32 %v1002, %v883
        %v1004 = vrot.slane %v1003, 4
        %v1005 = vadd.f32 %v1003, %v1004
        %v1006 = vrot.slane %v1005, 2
        %v1007 = vadd.f32 %v1005, %v1006
        %v1008 = vrot.slane %v1007, 1
        %v1009 = vadd.f32 %v1007, %v1008
        %v1010 = vadd.f32 %v884, %v886
        %v1011 = vadd.f32 %v1010, %v888
        %v1012 = vadd.f32 %v1011, %v890
        %v1013 = vrot.slane %v1012, 4
        %v1014 = vadd.f32 %v1012, %v1013
        %v1015 = vrot.slane %v1014, 2
        %v1016 = vadd.f32 %v1014, %v1015
        %v1017 = vrot.slane %v1016, 1
        %v1018 = vadd.f32 %v1016, %v1017
        %v1019 = vadd.f32 %v885, %v887
        %v1020 = vadd.f32 %v1019, %v889
        %v1021 = vadd.f32 %v1020, %v891
        %v1022 = vrot.slane %v1021, 4
        %v1023 = vadd.f32 %v1021, %v1022
        %v1024 = vrot.slane %v1023, 2
        %v1025 = vadd.f32 %v1023, %v1024
        %v1026 = vrot.slane %v1025, 1
        %v1027 = vadd.f32 %v1025, %v1026
        %v1028 = vadd.f32 %v892, %v894
        %v1029 = vadd.f32 %v1028, %v896
        %v1030 = vadd.f32 %v1029, %v898
        %v1031 = vrot.slane %v1030, 4
        %v1032 = vadd.f32 %v1030, %v1031
        %v1033 = vrot.slane %v1032, 2
        %v1034 = vadd.f32 %v1032, %v1033
        %v1035 = vrot.slane %v1034, 1
        %v1036 = vadd.f32 %v1034, %v1035
        %v1037 = vadd.f32 %v893, %v895
        %v1038 = vadd.f32 %v1037, %v897
        %v1039 = vadd.f32 %v1038, %v899
        %v1040 = vrot.slane %v1039, 4
        %v1041 = vadd.f32 %v1039, %v1040
        %v1042 = vrot.slane %v1041, 2
        %v1043 = vadd.f32 %v1041, %v1042
        %v1044 = vrot.slane %v1043, 1
        %v1045 = vadd.f32 %v1043, %v1044
        %vm1062 = vcmask 1041409
        %v1063 = vsel %vm1062, %v928, %v910
        %vm1064 = vcmask 1042434
        %v1065 = vsel %vm1064, %v946, %v1063
        %vm1066 = vcmask 1043459
        %v1067 = vsel %vm1066, %v964, %v1065
        %vm1068 = vcmask 1044484
        %v1069 = vsel %vm1068, %v982, %v1067
        %vm1070 = vcmask 1045509
        %v1071 = vsel %vm1070, %v1000, %v1069
        %vm1072 = vcmask 1046534
        %v1073 = vsel %vm1072, %v1018, %v1071
        %vm1074 = vcmask 1047559
        %v1075 = vsel %vm1074, %v1036, %v1073
        %v1076 = vsel %vm1062, %v937, %v919
        %v1077 = vsel %vm1064, %v955, %v1076
        %v1078 = vsel %vm1066, %v973, %v1077
        %v1079 = vsel %vm1068, %v991, %v1078
        %v1080 = vsel %vm1070, %v1009, %v1079
        %v1081 = vsel %vm1072, %v1027, %v1080
        %v1082 = vsel %vm1074, %v1045, %v1081
        %v1085 = vadd.f32 %v900, %v1075
        %v1086 = vadd.f32 %v901, %v1082
        %1087 = vst [vmem:[#allocation2] sm:$0xff] %v1085
        %1088 = vst [vmem:[#allocation2 + $0x8] sm:$0xff] %v1086
        %p1089 = scmp.eq.s32.totalorder %s30, 1
        // Predicated region
        $region103: #{scorer_forward.1} parent=89 // pred_check
          %p1090 = pneg %p1089
        $region104: #{scorer_forward.1} parent=89 // pred_check_branch
          %1092 = sbr.rel (%p1090) target = $region106
        $region105: #{scorer_forward.1} parent=89 // pred_region
          %v1093 = vld [vmem:[%s566 + $0x18] sm:$0x88]
          %v1094 = vld [vmem:[%s566 + $0x38] sm:$0x88]
          %v1095 = vld [vmem:[%s566 + $0x58] sm:$0x88]
          %v1096 = vld [vmem:[%s566 + $0x78] sm:$0x88]
          %v1097 = vld [vmem:[%s566 + $0x98] sm:$0x88]
          %v1098 = vld [vmem:[%s566 + $0xb8] sm:$0x88]
          %v1099 = vld [vmem:[%s566 + $0xd8] sm:$0x88]
          %v1100 = vld [vmem:[%s566 + $0xf8] sm:$0x88]
          %v1101 = vunpack.c.l.bf16 %v1093
          %v1102 = vunpack.c.h.bf16 %v1093
          %v1103 = vunpack.c.l.bf16 %v1094
          %v1104 = vunpack.c.h.bf16 %v1094
          %v1105 = vunpack.c.l.bf16 %v1095
          %v1106 = vunpack.c.h.bf16 %v1095
          %v1107 = vunpack.c.l.bf16 %v1096
          %v1108 = vunpack.c.h.bf16 %v1096
          %v1109 = vunpack.c.l.bf16 %v1097
          %v1110 = vunpack.c.h.bf16 %v1097
          %v1111 = vunpack.c.l.bf16 %v1098
          %v1112 = vunpack.c.h.bf16 %v1098
          %v1113 = vunpack.c.l.bf16 %v1099
          %v1114 = vunpack.c.h.bf16 %v1099
          %v1115 = vunpack.c.l.bf16 %v1100
          %v1116 = vunpack.c.h.bf16 %v1100
          %v1117 = vld [vmem:[%s574 + $0x18] sm:$0x88]
          %v1118 = vld [vmem:[%s574 + $0x38] sm:$0x88]
          %v1119 = vld [vmem:[%s574 + $0x58] sm:$0x88]
          %v1120 = vld [vmem:[%s574 + $0x78] sm:$0x88]
          %v1121 = vld [vmem:[%s574 + $0x98] sm:$0x88]
          %v1122 = vld [vmem:[%s574 + $0xb8] sm:$0x88]
          %v1123 = vld [vmem:[%s574 + $0xd8] sm:$0x88]
          %v1124 = vld [vmem:[%s574 + $0xf8] sm:$0x88]
          %v1125 = vunpack.c.l.bf16 %v1117
          %v1126 = vunpack.c.h.bf16 %v1117
          %v1127 = vunpack.c.l.bf16 %v1118
          %v1128 = vunpack.c.h.bf16 %v1118
          %v1129 = vunpack.c.l.bf16 %v1119
          %v1130 = vunpack.c.h.bf16 %v1119
          %v1131 = vunpack.c.l.bf16 %v1120
          %v1132 = vunpack.c.h.bf16 %v1120
          %v1133 = vunpack.c.l.bf16 %v1121
          %v1134 = vunpack.c.h.bf16 %v1121
          %v1135 = vunpack.c.l.bf16 %v1122
          %v1136 = vunpack.c.h.bf16 %v1122
          %v1137 = vunpack.c.l.bf16 %v1123
          %v1138 = vunpack.c.h.bf16 %v1123
          %v1139 = vunpack.c.l.bf16 %v1124
          %v1140 = vunpack.c.h.bf16 %v1124
          %v1141 = vsub.f32 %v1101, %v1125
          %v1142 = vsub.f32 %v1102, %v1126
          %v1143 = vsub.f32 %v1103, %v1127
          %v1144 = vsub.f32 %v1104, %v1128
          %v1145 = vsub.f32 %v1105, %v1129
          %v1146 = vsub.f32 %v1106, %v1130
          %v1147 = vsub.f32 %v1107, %v1131
          %v1148 = vsub.f32 %v1108, %v1132
          %v1149 = vsub.f32 %v1109, %v1133
          %v1150 = vsub.f32 %v1110, %v1134
          %v1151 = vsub.f32 %v1111, %v1135
          %v1152 = vsub.f32 %v1112, %v1136
          %v1153 = vsub.f32 %v1113, %v1137
          %v1154 = vsub.f32 %v1114, %v1138
          %v1155 = vsub.f32 %v1115, %v1139
          %v1156 = vsub.f32 %v1116, %v1140
          %v1157 = vld [vmem:[#allocation2] sm:$0xff]
          %v1158 = vld [vmem:[#allocation2 + $0x8] sm:$0xff]
          %v1175 = vrot.slane %v1141, 7
          %v1176 = vrot.slane %v1143, 6
          %v1177 = vsel %vm1062, %v1176, %v1175
          %v1178 = vrot.slane %v1145, 5
          %v1179 = vsel %vm1064, %v1178, %v1177
          %v1180 = vrot.slane %v1147, 4
          %v1181 = vsel %vm1066, %v1180, %v1179
          %v1182 = vrot.slane %v1149, 3
          %v1183 = vsel %vm1068, %v1182, %v1181
          %v1184 = vrot.slane %v1151, 2
          %v1185 = vsel %vm1070, %v1184, %v1183
          %v1186 = vrot.slane %v1153, 1
          %v1187 = vsel %vm1072, %v1186, %v1185
          %v1188 = vsel %vm1074, %v1155, %v1187
          %v1189 = vrot.slane %v1142, 7
          %v1190 = vrot.slane %v1144, 6
          %v1191 = vsel %vm1062, %v1190, %v1189
          %v1192 = vrot.slane %v1146, 5
          %v1193 = vsel %vm1064, %v1192, %v1191
          %v1194 = vrot.slane %v1148, 4
          %v1195 = vsel %vm1066, %v1194, %v1193
          %v1196 = vrot.slane %v1150, 3
          %v1197 = vsel %vm1068, %v1196, %v1195
          %v1198 = vrot.slane %v1152, 2
          %v1199 = vsel %vm1070, %v1198, %v1197
          %v1200 = vrot.slane %v1154, 1
          %v1201 = vsel %vm1072, %v1200, %v1199
          %v1202 = vsel %vm1074, %v1156, %v1201
          %v1205 = vsub.f32 %v1157, %v1188
          %v1206 = vsub.f32 %v1158, %v1202
          %v1207 = vmul.f32 %v1205, 0.015873017
          %v1208 = vmul.f32 %v1206, 0.015873017
          %v1209 = vand.u32 2147483647, %v1207
          %v1210 = vand.u32 2147483647, %v1208
          %v1211 = vld [vmem:[%s3] sm:$0xff]
          %v1212 = vld [vmem:[%s3 + $0x8] sm:$0xff]
          %v1213 = vld [vmem:[%s3 + $0x10] sm:$0xff]
          %v1214 = vld [vmem:[%s3 + $0x18] sm:$0xff]
          %v1215 = vld [vmem:[%s3 + $0x20] sm:$0xff]
          %v1216 = vld [vmem:[%s3 + $0x28] sm:$0xff]
          %v1217 = vld [vmem:[%s3 + $0x30] sm:$0xff]
          %v1218 = vld [vmem:[%s3 + $0x38] sm:$0xff]
          %v1219 = vld [vmem:[%s3 + $0x40] sm:$0xff]
          %v1220 = vld [vmem:[%s3 + $0x48] sm:$0xff]
          %v1221 = vld [vmem:[%s3 + $0x50] sm:$0xff]
          %v1222 = vld [vmem:[%s3 + $0x58] sm:$0xff]
          %v1223 = vld [vmem:[%s3 + $0x60] sm:$0xff]
          %v1224 = vld [vmem:[%s3 + $0x68] sm:$0xff]
          %v1225 = vld [vmem:[%s3 + $0x70] sm:$0xff]
          %v1226 = vld [vmem:[%s3 + $0x78] sm:$0xff]
          %v1227 = vld [vmem:[%s3 + $0x80] sm:$0xff]
          %v1228 = vld [vmem:[%s3 + $0x88] sm:$0xff]
          %v1229 = vld [vmem:[%s3 + $0x90] sm:$0xff]
          %v1230 = vld [vmem:[%s3 + $0x98] sm:$0xff]
          %v1231 = vld [vmem:[%s3 + $0xa0] sm:$0xff]
          %v1232 = vld [vmem:[%s3 + $0xa8] sm:$0xff]
          %v1233 = vld [vmem:[%s3 + $0xb0] sm:$0xff]
          %v1234 = vld [vmem:[%s3 + $0xb8] sm:$0xff]
          %v1235 = vld [vmem:[%s3 + $0xc0] sm:$0xff]
          %v1236 = vld [vmem:[%s3 + $0xc8] sm:$0xff]
          %v1237 = vld [vmem:[%s3 + $0xd0] sm:$0xff]
          %v1238 = vld [vmem:[%s3 + $0xd8] sm:$0xff]
          %v1239 = vld [vmem:[%s3 + $0xe0] sm:$0xff]
          %v1240 = vld [vmem:[%s3 + $0xe8] sm:$0xff]
          %v1241 = vld [vmem:[%s3 + $0xf0] sm:$0xff]
          %v1242 = vld [vmem:[%s3 + $0xf8] sm:$0xff]
          %v1243 = vld [vmem:[%s3 + $0x100] sm:$0xff]
          %v1244 = vld [vmem:[%s3 + $0x108] sm:$0xff]
          %v1245 = vld [vmem:[%s3 + $0x110] sm:$0xff]
          %v1246 = vld [vmem:[%s3 + $0x118] sm:$0xff]
          %v1247 = vld [vmem:[%s3 + $0x120] sm:$0xff]
          %v1248 = vld [vmem:[%s3 + $0x128] sm:$0xff]
          %v1249 = vld [vmem:[%s3 + $0x130] sm:$0xff]
          %v1250 = vld [vmem:[%s3 + $0x138] sm:$0xff]
          %v1251 = vld [vmem:[%s3 + $0x140] sm:$0xff]
          %v1252 = vld [vmem:[%s3 + $0x148] sm:$0xff]
          %v1253 = vld [vmem:[%s3 + $0x150] sm:$0xff]
          %v1254 = vld [vmem:[%s3 + $0x158] sm:$0xff]
          %v1255 = vld [vmem:[%s3 + $0x160] sm:$0xff]
          %v1256 = vld [vmem:[%s3 + $0x168] sm:$0xff]
          %v1257 = vld [vmem:[%s3 + $0x170] sm:$0xff]
          %v1258 = vld [vmem:[%s3 + $0x178] sm:$0xff]
          %v1259 = vld [vmem:[%s3 + $0x180] sm:$0xff]
          %v1260 = vld [vmem:[%s3 + $0x188] sm:$0xff]
          %v1261 = vld [vmem:[%s3 + $0x190] sm:$0xff]
          %v1262 = vld [vmem:[%s3 + $0x198] sm:$0xff]
          %v1263 = vld [vmem:[%s3 + $0x1a0] sm:$0xff]
          %v1264 = vld [vmem:[%s3 + $0x1a8] sm:$0xff]
          %v1265 = vld [vmem:[%s3 + $0x1b0] sm:$0xff]
          %v1266 = vld [vmem:[%s3 + $0x1b8] sm:$0xff]
          %v1267 = vld [vmem:[%s3 + $0x1c0] sm:$0xff]
          %v1268 = vld [vmem:[%s3 + $0x1c8] sm:$0xff]
          %v1269 = vld [vmem:[%s3 + $0x1d0] sm:$0xff]
          %v1270 = vld [vmem:[%s3 + $0x1d8] sm:$0xff]
          %v1271 = vld [vmem:[%s3 + $0x1e0] sm:$0xff]
          %v1272 = vld [vmem:[%s3 + $0x1e8] sm:$0xff]
          %v1273 = vld [vmem:[%s3 + $0x1f0] sm:$0xff]
          %v1274 = vld [vmem:[%s3 + $0x1f8] sm:$0xff]
          %v1275 = vld [vmem:[%s4] sm:$0x3]
          %v1277 = vlaneseq
          %v1278 = vshrl.u32 %v1277, 7
          %v1279 = vsub.s32 0, %v1278
          %v1280 = vrot.slane %v1275, %v1279
          %v1281 = vlaneseq
          %v1282 = vshrl.u32 %v1281, 7
          %v1283 = vsub.s32 1, %v1282
          %v1284 = vrot.slane %v1275, %v1283
          %1287 = vmatprep.subr.mxu0 %v1212
          %1288 = vmatpush1.msra.mxu0 %v1211
          %1289 = vmatprep.subr.mxu0 %v1214
          %1290 = vmatpush1.msra.mxu0 %v1213
          %1291 = vmatprep.subr.mxu0 %v1216
          %1292 = vmatpush1.msra.mxu0 %v1215
          %1293 = vmatprep.subr.mxu0 %v1218
          %1294 = vmatpush1.msra.mxu0 %v1217
          %1295 = vmatprep.subr.mxu0 %v1220
          %1296 = vmatpush1.msra.mxu0 %v1219
          %1297 = vmatprep.subr.mxu0 %v1222
          %1298 = vmatpush1.msra.mxu0 %v1221
          %1299 = vmatprep.subr.mxu0 %v1224
          %1300 = vmatpush1.msra.mxu0 %v1223
          %1301 = vmatprep.subr.mxu0 %v1226
          %1302 = vmatpush1.msra.mxu0 %v1225
          %1303 = vmatprep.subr.mxu0 %v1228
          %1304 = vmatpush1.msra.mxu0 %v1227
          %1305 = vmatprep.subr.mxu0 %v1230
          %1306 = vmatpush1.msra.mxu0 %v1229
          %1307 = vmatprep.subr.mxu0 %v1232
          %1308 = vmatpush1.msra.mxu0 %v1231
          %1309 = vmatprep.subr.mxu0 %v1234
          %1310 = vmatpush1.msra.mxu0 %v1233
          %1311 = vmatprep.subr.mxu0 %v1236
          %1312 = vmatpush1.msra.mxu0 %v1235
          %1313 = vmatprep.subr.mxu0 %v1238
          %1314 = vmatpush1.msra.mxu0 %v1237
          %1315 = vmatprep.subr.mxu0 %v1240
          %1316 = vmatpush1.msra.mxu0 %v1239
          %1317 = vmatprep.subr.mxu0 %v1242
          %1318 = vmatpush1.msra.mxu0 %v1241
          %1319 = vmatprep.subr.mxu0 %v1244
          %1320 = vmatpush1.msra.mxu0 %v1243
          %1321 = vmatprep.subr.mxu0 %v1246
          %1322 = vmatpush1.msra.mxu0 %v1245
          %1323 = vmatprep.subr.mxu0 %v1248
          %1324 = vmatpush1.msra.mxu0 %v1247
          %1325 = vmatprep.subr.mxu0 %v1250
          %1326 = vmatpush1.msra.mxu0 %v1249
          %1327 = vmatprep.subr.mxu0 %v1252
          %1328 = vmatpush1.msra.mxu0 %v1251
          %1329 = vmatprep.subr.mxu0 %v1254
          %1330 = vmatpush1.msra.mxu0 %v1253
          %1331 = vmatprep.subr.mxu0 %v1256
          %1332 = vmatpush1.msra.mxu0 %v1255
          %1333 = vmatprep.subr.mxu0 %v1258
          %1334 = vmatpush1.msra.mxu0 %v1257
          %1335 = vmatprep.subr.mxu0 %v1260
          %1336 = vmatpush1.msra.mxu0 %v1259
          %1337 = vmatprep.subr.mxu0 %v1262
          %1338 = vmatpush1.msra.mxu0 %v1261
          %1339 = vmatprep.subr.mxu0 %v1264
          %1340 = vmatpush1.msra.mxu0 %v1263
          %1341 = vmatprep.subr.mxu0 %v1266
          %1342 = vmatpush1.msra.mxu0 %v1265
          %1343 = vmatprep.subr.mxu0 %v1268
          %1344 = vmatpush1.msra.mxu0 %v1267
          %1345 = vmatprep.subr.mxu0 %v1270
          %1346 = vmatpush1.msra.mxu0 %v1269
          %1347 = vmatprep.subr.mxu0 %v1272
          %1348 = vmatpush1.msra.mxu0 %v1271
          %1349 = vmatprep.subr.mxu0 %v1274
          %1350 = vmatpush1.msra.mxu0 %v1273
          %1351 = vmatprep.mubr.f32.mxu0 %v1210
          %1352 = vmatmul.mubr.f32.gmra.mrb[0].mxu0 %v1209
          %v1353 = vpop.f32.mrb[0].mxu0
          %v1354 = vadd.f32 %v1280, %v1353
          %v1355 = vpop.f32.mrb[0].mxu0
          %v1356 = vadd.f32 %v1284, %v1355
          %1357 = vdwg.mxu0
          %v1358 = vmul.f32 %v1354, 0.5
          %v1359 = vmul.f32 %v1356, 0.5
          %v1360 = vmul.f32 %v1354, 0.70710677
          %v1361 = vmul.f32 %v1356, 0.70710677
          %v1362 = verf.f32.pop %v1360
          %v1363 = verf.f32.pop %v1361
          %v1364 = vadd.f32 %v1362, 1.0
          %v1365 = vadd.f32 %v1363, 1.0
          %v1366 = vmul.f32 %v1358, %v1364
          %v1367 = vmul.f32 %v1359, %v1365
          %v1368 = vadd.f32 %v1366, %v1367
          %1369 = vadd.xlane.f32.xlu0 %v1368
          %v1370 = vpop.xlane.xlu0 %1369
          %v1371 = vrcp.pop 256.0
          %v1372 = vmul.f32 %v1370, %v1371
          %v1373 = vsub.f32 %v1366, %v1372
          %v1374 = vsub.f32 %v1367, %v1372
          %v1375 = vmul.f32 %v1373, %v1373
          %v1376 = vmul.f32 %v1374, %v1374
          %v1377 = vadd.f32 %v1375, %v1376
          %1378 = vadd.xlane.f32.xlu0 %v1377
          %v1379 = vpop.xlane.xlu0 %1378
          %v1380 = vmul.f32 %v1379, %v1371
          %v1381 = vadd.f32 %v1380, 1e-05
          %v1382 = vrsqrt.pop %v1381
          %v1383 = vmul.f32 %v1373, %v1382
          %v1384 = vmul.f32 %v1374, %v1382
          %v1385 = vld [vmem:[%s5] sm:$0x3]
          %v1387 = vlaneseq
          %v1388 = vshrl.u32 %v1387, 7
          %v1389 = vsub.s32 0, %v1388
          %v1390 = vrot.slane %v1385, %v1389
          %v1391 = vlaneseq
          %v1392 = vshrl.u32 %v1391, 7
          %v1393 = vsub.s32 1, %v1392
          %v1394 = vrot.slane %v1385, %v1393
          %v1397 = vmul.f32 %v1383, %v1390
          %v1398 = vmul.f32 %v1384, %v1394
          %v1399 = vld [vmem:[%s6] sm:$0x3]
          %v1401 = vlaneseq
          %v1402 = vshrl.u32 %v1401, 7
          %v1403 = vsub.s32 0, %v1402
          %v1404 = vrot.slane %v1399, %v1403
          %v1405 = vlaneseq
          %v1406 = vshrl.u32 %v1405, 7
          %v1407 = vsub.s32 1, %v1406
          %v1408 = vrot.slane %v1399, %v1407
          %v1411 = vadd.f32 %v1397, %v1404
          %v1412 = vadd.f32 %v1398, %v1408
          %v1413 = vld [vmem:[%s7] sm:$0xff]
          %v1414 = vld [vmem:[%s7 + $0x8] sm:$0xff]
          %v1415 = vld [vmem:[%s7 + $0x10] sm:$0xff]
          %v1416 = vld [vmem:[%s7 + $0x18] sm:$0xff]
          %v1417 = vld [vmem:[%s7 + $0x20] sm:$0xff]
          %v1418 = vld [vmem:[%s7 + $0x28] sm:$0xff]
          %v1419 = vld [vmem:[%s7 + $0x30] sm:$0xff]
          %v1420 = vld [vmem:[%s7 + $0x38] sm:$0xff]
          %v1421 = vld [vmem:[%s7 + $0x40] sm:$0xff]
          %v1422 = vld [vmem:[%s7 + $0x48] sm:$0xff]
          %v1423 = vld [vmem:[%s7 + $0x50] sm:$0xff]
          %v1424 = vld [vmem:[%s7 + $0x58] sm:$0xff]
          %v1425 = vld [vmem:[%s7 + $0x60] sm:$0xff]
          %v1426 = vld [vmem:[%s7 + $0x68] sm:$0xff]
          %v1427 = vld [vmem:[%s7 + $0x70] sm:$0xff]
          %v1428 = vld [vmem:[%s7 + $0x78] sm:$0xff]
          %v1429 = vld [vmem:[%s7 + $0x80] sm:$0xff]
          %v1430 = vld [vmem:[%s7 + $0x88] sm:$0xff]
          %v1431 = vld [vmem:[%s7 + $0x90] sm:$0xff]
          %v1432 = vld [vmem:[%s7 + $0x98] sm:$0xff]
          %v1433 = vld [vmem:[%s7 + $0xa0] sm:$0xff]
          %v1434 = vld [vmem:[%s7 + $0xa8] sm:$0xff]
          %v1435 = vld [vmem:[%s7 + $0xb0] sm:$0xff]
          %v1436 = vld [vmem:[%s7 + $0xb8] sm:$0xff]
          %v1437 = vld [vmem:[%s7 + $0xc0] sm:$0xff]
          %v1438 = vld [vmem:[%s7 + $0xc8] sm:$0xff]
          %v1439 = vld [vmem:[%s7 + $0xd0] sm:$0xff]
          %v1440 = vld [vmem:[%s7 + $0xd8] sm:$0xff]
          %v1441 = vld [vmem:[%s7 + $0xe0] sm:$0xff]
          %v1442 = vld [vmem:[%s7 + $0xe8] sm:$0xff]
          %v1443 = vld [vmem:[%s7 + $0xf0] sm:$0xff]
          %v1444 = vld [vmem:[%s7 + $0xf8] sm:$0xff]
          %v1445 = vld [vmem:[%s8] sm:$0x1]
          %v1447 = vlaneseq
          %v1448 = vshrl.u32 %v1447, 7
          %v1449 = vsub.s32 0, %v1448
          %v1450 = vrot.slane %v1445, %v1449
          %1452 = vmatprep.subr.mxu0 0.0
          %1453 = vmatpush1.msra.mxu0 %v1413
          %1454 = vmatprep.subr.mxu0 0.0
          %1455 = vmatpush1.msra.mxu0 %v1414
          %1456 = vmatprep.subr.mxu0 0.0
          %1457 = vmatpush1.msra.mxu0 %v1415
          %1458 = vmatprep.subr.mxu0 0.0
          %1459 = vmatpush1.msra.mxu0 %v1416
          %1460 = vmatprep.subr.mxu0 0.0
          %1461 = vmatpush1.msra.mxu0 %v1417
          %1462 = vmatprep.subr.mxu0 0.0
          %1463 = vmatpush1.msra.mxu0 %v1418
          %1464 = vmatprep.subr.mxu0 0.0
          %1465 = vmatpush1.msra.mxu0 %v1419
          %1466 = vmatprep.subr.mxu0 0.0
          %1467 = vmatpush1.msra.mxu0 %v1420
          %1468 = vmatprep.subr.mxu0 0.0
          %1469 = vmatpush1.msra.mxu0 %v1421
          %1470 = vmatprep.subr.mxu0 0.0
          %1471 = vmatpush1.msra.mxu0 %v1422
          %1472 = vmatprep.subr.mxu0 0.0
          %1473 = vmatpush1.msra.mxu0 %v1423
          %1474 = vmatprep.subr.mxu0 0.0
          %1475 = vmatpush1.msra.mxu0 %v1424
          %1476 = vmatprep.subr.mxu0 0.0
          %1477 = vmatpush1.msra.mxu0 %v1425
          %1478 = vmatprep.subr.mxu0 0.0
          %1479 = vmatpush1.msra.mxu0 %v1426
          %1480 = vmatprep.subr.mxu0 0.0
          %1481 = vmatpush1.msra.mxu0 %v1427
          %1482 = vmatprep.subr.mxu0 0.0
          %1483 = vmatpush1.msra.mxu0 %v1428
          %1484 = vmatprep.subr.mxu0 0.0
          %1485 = vmatpush1.msra.mxu0 %v1429
          %1486 = vmatprep.subr.mxu0 0.0
          %1487 = vmatpush1.msra.mxu0 %v1430
          %1488 = vmatprep.subr.mxu0 0.0
          %1489 = vmatpush1.msra.mxu0 %v1431
          %1490 = vmatprep.subr.mxu0 0.0
          %1491 = vmatpush1.msra.mxu0 %v1432
          %1492 = vmatprep.subr.mxu0 0.0
          %1493 = vmatpush1.msra.mxu0 %v1433
          %1494 = vmatprep.subr.mxu0 0.0
          %1495 = vmatpush1.msra.mxu0 %v1434
          %1496 = vmatprep.subr.mxu0 0.0
          %1497 = vmatpush1.msra.mxu0 %v1435
          %1498 = vmatprep.subr.mxu0 0.0
          %1499 = vmatpush1.msra.mxu0 %v1436
          %1500 = vmatprep.subr.mxu0 0.0
          %1501 = vmatpush1.msra.mxu0 %v1437
          %1502 = vmatprep.subr.mxu0 0.0
          %1503 = vmatpush1.msra.mxu0 %v1438
          %1504 = vmatprep.subr.mxu0 0.0
          %1505 = vmatpush1.msra.mxu0 %v1439
          %1506 = vmatprep.subr.mxu0 0.0
          %1507 = vmatpush1.msra.mxu0 %v1440
          %1508 = vmatprep.subr.mxu0 0.0
          %1509 = vmatpush1.msra.mxu0 %v1441
          %1510 = vmatprep.subr.mxu0 0.0
          %1511 = vmatpush1.msra.mxu0 %v1442
          %1512 = vmatprep.subr.mxu0 0.0
          %1513 = vmatpush1.msra.mxu0 %v1443
          %1514 = vmatprep.subr.mxu0 0.0
          %1515 = vmatpush1.msra.mxu0 %v1444
          %1516 = vmatprep.mubr.f32.mxu0 %v1412
          %1517 = vmatmul.mubr.f32.gmra.mrb[0].mxu0 %v1411
          %v1518 = vpop.f32.mrb[0].mxu0
          %v1519 = vadd.f32 %v1450, %v1518
          %v1520 = vpop.f32.mrb[0].mxu0
          %1521 = vdwg.mxu0
          %1522 = vst [vmem:[%s633] sm:$0xff] %v1519
          %1523 = vmax.xlane.f32.xlu0 %v1519
          %v1524 = vpop.xlane.xlu0 %1523
          %v1525 = vsub.f32 %v1519, %v1524
          %v1526 = vmul.f32 %v1525, 1.442695
          %v1527 = vpow.pop %v1526
          %1528 = vadd.xlane.f32.xlu0 %v1527
          %v1529 = vpop.xlane.xlu0 %1528
          %v1530 = vlog2.pop %v1529
          %v1531 = vmul.f32 %v1530, 0.6931472
          %v1532 = vadd.f32 %v1524, %v1531
          %v1533 = vlaneseq
          %v1534 = vand.u32 %v1533, 127
          %v1535 = vld [vmem:[%s629] sm:$0xff]
          %1536 = vset.pattern.permute.xlu0 0
          %1537 = vperm.xlu0 %1536, %v1535
          %v1538 = vpop.permute.xlu0 %1537
          %vm1539 = vcmp.eq.s32.totalorder %v1534, %v1538
          %v1540 = vsel %vm1539, 1, 0
          %v1541 = vcvt.s32.f32 %v1540
          %v1542 = vmul.f32 %v1519, %v1541
          %1543 = vadd.xlane.f32.xlu0 %v1542
          %v1544 = vpop.xlane.xlu0 %1543
          %v1545 = vsub.f32 %v1532, %v1544
          %vm1546 = vcmask 7168
          %1547 = vst.msk [vmem:[%s637] sm:$0xff] %vm1546, %v1545
        $region106: #{scorer_forward.1} parent=89 // pred_fallthru
          _
        %p1548 = scmp.lt.s32.totalorder %s29, 1
        %s1549 = scalar_select %p1548, %s29, 1
        %s1550 = smul.addr %s1549, 8
        %s1551 = scalar_lea.vmem %s9, %s1550
        %p1552 = scmp.lt.s32.totalorder %s29, 1
        %s1553 = scalar_select %p1552, %s29, 1
        %s1554 = smul.addr %s1553, 8
        %s1555 = scalar_lea.vmem %s10, %s1554
        // Predicated region
        $region107: #{scorer_forward.1} parent=89 // pred_check
          %p1556 = pneg %p263
        $region108: #{scorer_forward.1} parent=89 // pred_check_branch
          %1558 = sbr.rel (%p1556) target = $region110
        $region109: #{scorer_forward.1} parent=89 // pred_region
          _
        $region110: #{scorer_forward.1} parent=89 // pred_fallthru
          _
        // Predicated region
        $region111: #{scorer_forward.1} parent=89 // pred_check
          %p1559 = pneg %p289
        $region112: #{scorer_forward.1} parent=89 // pred_check_branch
          %1561 = sbr.rel (%p1559) target = $region114
        $region113: #{scorer_forward.1} parent=89 // pred_region
          _
        $region114: #{scorer_forward.1} parent=89 // pred_fallthru
          _
      $region90: #{scorer_forward.1} parent=5 // pred_fallthru
        _
      %p1562 = scmp.le.s32.totalorder 2, %s20
      // Predicated region
      $region115: #{scorer_forward.1} parent=5 // pred_check
        %p1563 = pneg %p1562
      $region116: #{scorer_forward.1} parent=5 // pred_check_branch
        %1565 = sbr.rel (%p1563) target = $region118
      $region117: #{scorer_forward.1} parent=5 // pred_region
        %s1566 = ssub.s32 %s20, 2
        // Predicated region
        $region119: #{scorer_forward.1} parent=117 // pred_check
          %p1567 = pneg %p269
        $region120: #{scorer_forward.1} parent=117 // pred_check_branch
          %1569 = sbr.rel (%p1567) target = $region122
        $region121: #{scorer_forward.1} parent=117 // pred_region
          %p1570 = scmp.lt.s32.totalorder %s31, 1
          %s1571 = scalar_select %p1570, %s31, 1
          %s1572 = smul.addr %s1571, 8
          %s1573 = scalar_lea.vmem %s9, %s1572
        $region122: #{scorer_forward.1} parent=117 // pred_fallthru
          _
        // Predicated region
        $region123: #{scorer_forward.1} parent=117 // pred_check
          %p1574 = pneg %p295
        $region124: #{scorer_forward.1} parent=117 // pred_check_branch
          %1576 = sbr.rel (%p1574) target = $region126
        $region125: #{scorer_forward.1} parent=117 // pred_region
          %p1577 = scmp.lt.s32.totalorder %s31, 1
          %s1578 = scalar_select %p1577, %s31, 1
          %s1579 = smul.addr %s1578, 8
          %s1580 = scalar_lea.vmem %s10, %s1579
        $region126: #{scorer_forward.1} parent=117 // pred_fallthru
          _
      $region118: #{scorer_forward.1} parent=5 // pred_fallthru
        _
    $region6: #{scorer_forward.1} parent=1 // loop_footer
      %s24 = sadd.s32 1, %s20
    $region7: #{scorer_forward.1} parent=1 // loop_footer_branch
      %19 = sbr.rel target = $region3
    $region8: #{scorer_forward.1} parent=1 // loop_exit
      _
    %1581 = vsyncpa [#allocation5], 1
    %s1582 = scalar_lea.sflag [#allocation5], 1
    %1583 = vsyncpa %s1582, 1

</llo_original>
